<compile_context>
chip_gen: v5e
topology: v5e:2x2
jax: 0.10.0
libtpu: 0.0.40
codegen_flags: <defaults>
</compile_context>

<pallas_src>
import jax
import jax.numpy as jnp
from jax.experimental import pallas as pl
from jax.experimental.pallas import tpu as pltpu

HIDDEN = 768
FC1_OUT = 128
NUM_CLASSES = 3
EMBED_OUT = 256
LOGITS_PAD = 128                  # lane-dense padded logits width
HEAD_CAT = FC1_OUT + EMBED_OUT    # 384


def _round_up(x, m):
    return ((x + m - 1) // m) * m


def _vmem_capacity_bytes():
    try:
        return int(pltpu.get_tpu_info().vmem_capacity_bytes)
    except Exception:
        return 64 * 1024 * 1024   # conservative (v7x-sized) fallback


def _choose_tiles(B, S, vmem_cap):
    """Generation-aware tile choice for the (B, S) pooling grid."""
    # Per-buffer emb tile budget: ~VMEM/5 (double-buffered emb + mask +
    # weights + outputs + accumulator must all fit), capped at 32 MiB.
    budget = min(vmem_cap // 5, 32 * 1024 * 1024)

    if S >= 512:
        TS = 512
    elif S >= 256:
        TS = 256
    elif S >= 128:
        TS = 128
    else:
        TS = _round_up(S, 8)
    S_pad = _round_up(S, TS)

    B8 = _round_up(B, 8)
    row_bytes = TS * HIDDEN * 2                      # bf16 hidden state
    tb_cap = max(8, (budget // row_bytes) // 8 * 8)
    TB = max(8, min(B8, tb_cap, 256))
    # Keep >= 2 B-blocks so v7x's two TensorCores both get work.
    if B8 >= 16 and B8 // TB < 2:
        TB = max(8, (B8 // 2) // 8 * 8)
    B_pad = _round_up(B8, TB)
    return TB, TS, B_pad, S_pad


def _head_kernel(emb_ref, mask_ref, denom_ref, wcat_ref, bcat_ref, w2_ref,
                 b2_ref, logits_ref, embed_ref, sum_acc):
    # emb_ref:   (TB, TS, H)  bf16      mask_ref:  (TB, 1, TS) bf16
    # denom_ref: (TB, 1)      f32
    # wcat_ref:  (H, 384)     bf16      bcat_ref:  (1, 384) f32
    # w2_ref:    (128, 128)   bf16      b2_ref:    (1, 128) f32
    # logits_ref:(TB, 128)    f32       embed_ref: (TB, 256) f32
    # sum_acc:   (TB, H)      f32 scratch
    s = pl.program_id(1)

    @pl.when(s == 0)
    def _init():
        sum_acc[...] = jnp.zeros_like(sum_acc)

    # Masked sum over this seq tile as a batched MXU matvec.  mask ∈ {0,1}
    # is exact in bf16; accumulation is f32.  The MXU is otherwise idle
    # during the reduction steps, so this frees VPU / load-store slots.
    part = jnp.einsum('bqs,bsh->bqh', mask_ref[...], emb_ref[...],
                      preferred_element_type=jnp.float32)      # (TB, 1, H)
    sum_acc[...] += part[:, 0, :]

    @pl.when(s == pl.num_programs(1) - 1)
    def _finalize():
        pooled = sum_acc[...] * pl.reciprocal(denom_ref[...], approx=True)
        pooled_bf = pooled.astype(jnp.bfloat16)

        # one fused MXU matmul for fc1 + toEmbed:  pooled @ [w1 | w3]
        he = jnp.dot(pooled_bf, wcat_ref[...],
                     preferred_element_type=jnp.float32) + bcat_ref[...]
        h = jnp.maximum(he[:, :FC1_OUT], 0.0)        # fc1 + ReLU (dropout = id)
        embed_ref[...] = he[:, FC1_OUT:]             # toEmbed -> (TB, 256)

        # fc2 with lane-dense (128-wide, zero-padded) logits
        logits_ref[...] = (jnp.dot(h.astype(jnp.bfloat16), w2_ref[...],
                                   preferred_element_type=jnp.float32)
                           + b2_ref[...])


def head_forward(last_hidden_state, attention_mask, params):
    """Masked mean-pool + fc1/ReLU/fc2 + toEmbed in one tiled Pallas call."""
    B, S, H = last_hidden_state.shape
    assert H == HIDDEN

    vmem_cap = _vmem_capacity_bytes()
    TB, TS, B_pad, S_pad = _choose_tiles(B, S, vmem_cap)

    # --- weights: fused, bf16 (MXU-native), logits zero-padded to 128 lanes
    w_cat = jnp.concatenate([params["w1"], params["w3"]],
                            axis=1).astype(jnp.bfloat16)           # (768, 384)
    b_cat = jnp.concatenate([params["b1"], params["b3"]], axis=1)  # (1, 384) f32
    w2p = jnp.zeros((FC1_OUT, LOGITS_PAD), jnp.bfloat16)
    w2p = w2p.at[:, :NUM_CLASSES].set(params["w2"].astype(jnp.bfloat16))
    b2p = jnp.zeros((1, LOGITS_PAD), jnp.float32)
    b2p = b2p.at[:, :NUM_CLASSES].set(params["b2"])

    # --- activations: bf16 on the wire, denom computed wrapper-side --------
    emb = last_hidden_state
    if emb.dtype != jnp.bfloat16:
        emb = emb.astype(jnp.bfloat16)
    mask = attention_mask.astype(jnp.bfloat16)                     # (B, S)
    denom = jnp.maximum(
        attention_mask.astype(jnp.float32).sum(-1, keepdims=True), 1e-9)

    if B_pad != B or S_pad != S:   # pad only when actually needed
        emb = jnp.pad(emb, ((0, B_pad - B), (0, S_pad - S), (0, 0)))
        mask = jnp.pad(mask, ((0, B_pad - B), (0, S_pad - S)))
        denom = jnp.pad(denom, ((0, B_pad - B), (0, 0)), constant_values=1.0)
    mask3 = mask[:, None, :]                                       # (B_pad, 1, S_pad)

    grid = (B_pad // TB, S_pad // TS)

    # --- VMEM budget derived from tiles (double-buffered inputs/outputs) ---
    emb_tile = TB * _round_up(TS, 16) * HIDDEN * 2
    mask_tile = TB * _round_up(TS, 128) * 32        # (TB,1,TS) bf16, sublane-padded
    weights = (HIDDEN * HEAD_CAT * 2 + 8 * HEAD_CAT * 4
               + FC1_OUT * LOGITS_PAD * 2 + 8 * LOGITS_PAD * 4)
    outs = TB * (LOGITS_PAD + EMBED_OUT) * 4
    denom_t = TB * 128 * 4
    est = 2 * (emb_tile + mask_tile + weights + outs + denom_t) + TB * HIDDEN * 4
    vmem_limit = max(32 * 1024 * 1024,
                     min(est + 16 * 1024 * 1024, (vmem_cap * 3) // 4))

    logits_pad, embed = pl.pallas_call(
        _head_kernel,
        out_shape=(
            jax.ShapeDtypeStruct((B_pad, LOGITS_PAD), jnp.float32),
            jax.ShapeDtypeStruct((B_pad, EMBED_OUT), jnp.float32),
        ),
        grid_spec=pltpu.PrefetchScalarGridSpec(
            num_scalar_prefetch=0,
            grid=grid,
            in_specs=[
                pl.BlockSpec((TB, TS, HIDDEN), lambda b, s: (b, s, 0)),
                pl.BlockSpec((TB, 1, TS), lambda b, s: (b, 0, s)),
                pl.BlockSpec((TB, 1), lambda b, s: (b, 0)),
                pl.BlockSpec((HIDDEN, HEAD_CAT), lambda b, s: (0, 0)),
                pl.BlockSpec((1, HEAD_CAT), lambda b, s: (0, 0)),
                pl.BlockSpec((FC1_OUT, LOGITS_PAD), lambda b, s: (0, 0)),
                pl.BlockSpec((1, LOGITS_PAD), lambda b, s: (0, 0)),
            ],
            out_specs=(
                pl.BlockSpec((TB, LOGITS_PAD), lambda b, s: (b, 0)),
                pl.BlockSpec((TB, EMBED_OUT), lambda b, s: (b, 0)),
            ),
            scratch_shapes=[pltpu.VMEM((TB, HIDDEN), jnp.float32)],
        ),
        compiler_params=pltpu.CompilerParams(
            dimension_semantics=("parallel", "arbitrary"),
            vmem_limit_bytes=int(vmem_limit),
        ),
    )(emb, mask3, denom, w_cat, b_cat, w2p, b2p)

    return logits_pad[:B, :NUM_CLASSES], embed[:B]


def init_params(key):
    """Deterministic parameter init; Linear weights stored as (in, out)."""
    k1, k2, k3, k4 = jax.random.split(key, 4)
    scale = 0.02
    return {
        "w1": scale * jax.random.normal(k1, (HIDDEN, FC1_OUT), jnp.float32),
        "b1": jnp.zeros((1, FC1_OUT), jnp.float32),
        "w2": scale * jax.random.normal(k2, (FC1_OUT, NUM_CLASSES), jnp.float32),
        "b2": jnp.zeros((1, NUM_CLASSES), jnp.float32),
        "w3": scale * jax.random.normal(k3, (HIDDEN, EMBED_OUT), jnp.float32),
        "b3": jnp.zeros((1, EMBED_OUT), jnp.float32),
        # stand-in token-embedding table for the BERT encoder (bf16 on wire)
        "tok_emb": (scale * jax.random.normal(k4, (1000, HIDDEN), jnp.float32)
                    ).astype(jnp.bfloat16),
    }


def mymodel6_forward(params, x_inputs, x_atts, p_inputs=None, p_atts=None,
                     n_inputs=None, n_atts=None):
    # TODO(synk): full klue/bert-base transformer encoder is not translated;
    # stand-in deterministic embedding lookup produces `last_hidden_state`.
    def encode(ids):
        return params["tok_emb"][ids]                # (B, S, 768) bf16

    if p_inputs is not None and n_inputs is not None:
        # one batched kernel call over [x; p; n] instead of three calls
        B = x_inputs.shape[0]
        ids = jnp.concatenate([x_inputs, p_inputs, n_inputs], axis=0)
        atts = jnp.concatenate([x_atts, p_atts, n_atts], axis=0)
        logits_all, embed_all = head_forward(encode(ids), atts, params)
        x_logits = logits_all[:B]
        x_embed = embed_all[:B]
        p_embed = embed_all[B:2 * B]
        n_embed = embed_all[2 * B:3 * B]
        return x_logits, x_embed, p_embed, n_embed

    x_hidden = encode(x_inputs)
    return head_forward(x_hidden, x_atts, params)


def _reference(params, ids, atts):
    """Pure-JAX reference mirroring the kernel's precision choices."""
    emb = params["tok_emb"][ids].astype(jnp.float32)        # bf16 values
    mask = atts.astype(jnp.float32)
    summed = jnp.einsum('bs,bsh->bh', mask, emb)
    denom = jnp.maximum(mask.sum(-1, keepdims=True), 1e-9)
    pooled = (summed / denom).astype(jnp.bfloat16).astype(jnp.float32)
    w1 = params["w1"].astype(jnp.bfloat16).astype(jnp.float32)
    w2 = params["w2"].astype(jnp.bfloat16).astype(jnp.float32)
    w3 = params["w3"].astype(jnp.bfloat16).astype(jnp.float32)
    h = jnp.maximum(pooled @ w1 + params["b1"], 0.0)
    h = h.astype(jnp.bfloat16).astype(jnp.float32)
    logits = h @ w2 + params["b2"]
    embed = pooled @ w3 + params["b3"]
    return logits, embed


if __name__ == "__main__":
    key = jax.random.PRNGKey(0)
    params = init_params(key)

    B, S = 2, 8
    kid, _ = jax.random.split(jax.random.PRNGKey(1))
    x_inputs = jax.random.randint(kid, (B, S), 0, 1000, dtype=jnp.int32)
    # attention mask: first row fully valid, second row half-padded
    x_atts = jnp.array([[1] * S, [1] * (S // 2) + [0] * (S // 2)], dtype=jnp.int32)

    logits, x_embed = mymodel6_forward(params, x_inputs, x_atts)
    jax.block_until_ready((logits, x_embed))

    ref_logits, ref_embed = _reference(params, x_inputs, x_atts)
    assert logits.shape == (B, NUM_CLASSES)
    assert x_embed.shape == (B, EMBED_OUT)
    assert jnp.allclose(logits, ref_logits, atol=2e-3)
    assert jnp.allclose(x_embed, ref_embed, atol=2e-3)

    # triplet (x/p/n) path: single batched kernel call
    kp, kn = jax.random.split(jax.random.PRNGKey(2))
    p_inputs = jax.random.randint(kp, (B, S), 0, 1000, dtype=jnp.int32)
    n_inputs = jax.random.randint(kn, (B, S), 0, 1000, dtype=jnp.int32)
    p_atts = jnp.ones((B, S), dtype=jnp.int32)
    n_atts = jnp.ones((B, S), dtype=jnp.int32)
    x_lg2, x_em2, p_em, n_em = mymodel6_forward(
        params, x_inputs, x_atts, p_inputs, p_atts, n_inputs, n_atts)
    jax.block_until_ready((x_lg2, x_em2, p_em, n_em))
    assert x_lg2.shape == (B, NUM_CLASSES)
    assert p_em.shape == (B, EMBED_OUT) and n_em.shape == (B, EMBED_OUT)
    assert jnp.allclose(x_lg2, logits, atol=1e-4)
    assert jnp.allclose(x_em2, x_embed, atol=1e-4)

    print("KERNEL_OK")
</pallas_src>

<mosaic_0001>
module attributes {stable_mosaic.version = 11 : i64} {
  func.func @_head_kernel(%arg0: i32, %arg1: i32, %arg2: memref<8x8x768xbf16, #tpu.memory_space<vmem>>, %arg3: memref<8x1x8xbf16, #tpu.memory_space<vmem>>, %arg4: memref<8x1xf32, #tpu.memory_space<vmem>>, %arg5: memref<768x384xbf16, #tpu.memory_space<vmem>>, %arg6: memref<1x384xf32, #tpu.memory_space<vmem>>, %arg7: memref<128x128xbf16, #tpu.memory_space<vmem>>, %arg8: memref<1x128xf32, #tpu.memory_space<vmem>>, %arg9: memref<8x128xf32, #tpu.memory_space<vmem>>, %arg10: memref<8x256xf32, #tpu.memory_space<vmem>>, %arg11: memref<8x768xf32, #tpu.memory_space<vmem>>) attributes {dimension_semantics = [#tpu.dimension_semantics<parallel>, #tpu.dimension_semantics<arbitrary>], iteration_bounds = array<i64: 1, 1>, scalar_prefetch = 0 : i64, scratch_operands = 1 : i64, tpu.core_type = #tpu.core_type<tc>, window_params = [{transform_indices = @transform_0, window_bounds = array<i64: 8, 8, 768>}, {transform_indices = @transform_1, window_bounds = array<i64: 8, 1, 8>}, {transform_indices = @transform_2, window_bounds = array<i64: 8, 1>}, {pipeline_mode = #tpu.pipeline_mode<synchronous>, transform_indices = @transform_3, window_bounds = array<i64: 768, 384>}, {pipeline_mode = #tpu.pipeline_mode<synchronous>, transform_indices = @transform_4, window_bounds = array<i64: 1, 384>}, {pipeline_mode = #tpu.pipeline_mode<synchronous>, transform_indices = @transform_5, window_bounds = array<i64: 128, 128>}, {pipeline_mode = #tpu.pipeline_mode<synchronous>, transform_indices = @transform_6, window_bounds = array<i64: 1, 128>}, {transform_indices = @transform_7, window_bounds = array<i64: 8, 128>}, {transform_indices = @transform_8, window_bounds = array<i64: 8, 256>}]} {
    %c0_i32 = arith.constant 0 : i32
    %0 = arith.cmpi eq, %arg1, %c0_i32 : i32
    %1 = arith.extui %0 : i1 to i32
    %c0_i32_0 = arith.constant 0 : i32
    %2 = arith.cmpi ne, %1, %c0_i32_0 : i32
    scf.if %2 {
      %cst_12 = arith.constant 0.000000e+00 : f32
      %13 = vector.broadcast %cst_12 : f32 to vector<8x768xf32>
      %c0_13 = arith.constant 0 : index
      %c0_14 = arith.constant 0 : index
      %14 = vector.load %arg11[%c0_13, %c0_14] : memref<8x768xf32, #tpu.memory_space<vmem>>, vector<8x768xf32>
      tpu.vector_store %arg11[%c0_13, %c0_14], %13 {strides = array<i32>} : memref<8x768xf32, #tpu.memory_space<vmem>>, vector<8x768xf32>,
    } else {
    }
    %c0 = arith.constant 0 : index
    %c0_1 = arith.constant 0 : index
    %c0_2 = arith.constant 0 : index
    %3 = vector.load %arg3[%c0, %c0_1, %c0_2] : memref<8x1x8xbf16, #tpu.memory_space<vmem>>, vector<8x1x8xbf16>
    %c0_3 = arith.constant 0 : index
    %c0_4 = arith.constant 0 : index
    %c0_5 = arith.constant 0 : index
    %4 = vector.load %arg2[%c0_3, %c0_4, %c0_5] : memref<8x8x768xbf16, #tpu.memory_space<vmem>>, vector<8x8x768xbf16>
    "tpu.trace_start"() <{level = 10 : i32, message = "bqs,bsh->bqh"}> : () -> ()
    %cst = arith.constant dense<0.000000e+00> : vector<8x1x768xf32>
    %5 = tpu.matmul %3, %4, %cst {dimension_numbers = #tpu.dot_dimension_numbers<[2], [1], [1], [2], [0, 0, 0, 1, 1, 2], [0], [0]>} : vector<8x1x8xbf16>, vector<8x8x768xbf16>, vector<8x1x768xf32> -> vector<8x1x768xf32>
    "tpu.trace_stop"() : () -> ()
    %c0_6 = arith.constant 0 : index
    %c0_7 = arith.constant 0 : index
    %6 = vector.load %arg11[%c0_6, %c0_7] : memref<8x768xf32, #tpu.memory_space<vmem>>, vector<8x768xf32>
    %7 = vector.shape_cast %5 : vector<8x1x768xf32> to vector<8x768xf32>
    %8 = arith.addf %6, %7 : vector<8x768xf32>
    %c0_8 = arith.constant 0 : index
    %c0_9 = arith.constant 0 : index
    %9 = vector.load %arg11[%c0_8, %c0_9] : memref<8x768xf32, #tpu.memory_space<vmem>>, vector<8x768xf32>
    tpu.vector_store %arg11[%c0_8, %c0_9], %8 {strides = array<i32>} : memref<8x768xf32, #tpu.memory_space<vmem>>, vector<8x768xf32>,
    %c0_i32_10 = arith.constant 0 : i32
    %10 = arith.cmpi eq, %arg1, %c0_i32_10 : i32
    %11 = arith.extui %10 : i1 to i32
    %c0_i32_11 = arith.constant 0 : i32
    %12 = arith.cmpi ne, %11, %c0_i32_11 : i32
    scf.if %12 {
      %c0_12 = arith.constant 0 : index
      %c0_13 = arith.constant 0 : index
      %13 = vector.load %arg11[%c0_12, %c0_13] : memref<8x768xf32, #tpu.memory_space<vmem>>, vector<8x768xf32>
      %c0_14 = arith.constant 0 : index
      %c0_15 = arith.constant 0 : index
      %14 = vector.load %arg4[%c0_14, %c0_15] : memref<8x1xf32, #tpu.memory_space<vmem>>, vector<8x1xf32>
      %15 = tpu.reciprocal %14 {approx = true} : vector<8x1xf32> -> vector<8x1xf32>
      %16 = vector.broadcast %15 : vector<8x1xf32> to vector<8x768xf32>
      %17 = arith.mulf %13, %16 : vector<8x768xf32>
      %18 = arith.truncf %17 : vector<8x768xf32> to vector<8x768xbf16>
      %c0_16 = arith.constant 0 : index
      %c0_17 = arith.constant 0 : index
      %19 = vector.load %arg5[%c0_16, %c0_17] : memref<768x384xbf16, #tpu.memory_space<vmem>>, vector<768x384xbf16>
      %cst_18 = arith.constant dense<0.000000e+00> : vector<8x384xf32>
      %20 = tpu.matmul %18, %19, %cst_18 {dimension_numbers = #tpu.dot_dimension_numbers<[1], [0], [0], [1], [0, 0, 1, 1], [], []>} : vector<8x768xbf16>, vector<768x384xbf16>, vector<8x384xf32> -> vector<8x384xf32>
      %c0_19 = arith.constant 0 : index
      %c0_20 = arith.constant 0 : index
      %21 = vector.load %arg6[%c0_19, %c0_20] : memref<1x384xf32, #tpu.memory_space<vmem>>, vector<1x384xf32>
      %22 = vector.broadcast %21 : vector<1x384xf32> to vector<8x384xf32>
      %23 = arith.addf %20, %22 : vector<8x384xf32>
      %24 = vector.extract_strided_slice %23 {offsets = [0, 0], sizes = [8, 128], strides = [1, 1]} : vector<8x384xf32> to vector<8x128xf32>
      %cst_21 = arith.constant 0.000000e+00 : f32
      %25 = vector.broadcast %cst_21 : f32 to vector<8x128xf32>
      %26 = arith.maximumf %24, %25 : vector<8x128xf32>
      %27 = vector.extract_strided_slice %23 {offsets = [0, 128], sizes = [8, 256], strides = [1, 1]} : vector<8x384xf32> to vector<8x256xf32>
      %c0_22 = arith.constant 0 : index
      %c0_23 = arith.constant 0 : index
      %28 = vector.load %arg10[%c0_22, %c0_23] : memref<8x256xf32, #tpu.memory_space<vmem>>, vector<8x256xf32>
      tpu.vector_store %arg10[%c0_22, %c0_23], %27 {strides = array<i32>} : memref<8x256xf32, #tpu.memory_space<vmem>>, vector<8x256xf32>,
      %29 = arith.truncf %26 : vector<8x128xf32> to vector<8x128xbf16>
      %c0_24 = arith.constant 0 : index
      %c0_25 = arith.constant 0 : index
      %30 = vector.load %arg7[%c0_24, %c0_25] : memref<128x128xbf16, #tpu.memory_space<vmem>>, vector<128x128xbf16>
      %cst_26 = arith.constant dense<0.000000e+00> : vector<8x128xf32>
      %31 = tpu.matmul %29, %30, %cst_26 {dimension_numbers = #tpu.dot_dimension_numbers<[1], [0], [0], [1], [0, 0, 1, 1], [], []>} : vector<8x128xbf16>, vector<128x128xbf16>, vector<8x128xf32> -> vector<8x128xf32>
      %c0_27 = arith.constant 0 : index
      %c0_28 = arith.constant 0 : index
      %32 = vector.load %arg8[%c0_27, %c0_28] : memref<1x128xf32, #tpu.memory_space<vmem>>, vector<1x128xf32>
      %33 = vector.broadcast %32 : vector<1x128xf32> to vector<8x128xf32>
      %34 = arith.addf %31, %33 : vector<8x128xf32>
      %c0_29 = arith.constant 0 : index
      %c0_30 = arith.constant 0 : index
      %35 = vector.load %arg9[%c0_29, %c0_30] : memref<8x128xf32, #tpu.memory_space<vmem>>, vector<8x128xf32>
      tpu.vector_store %arg9[%c0_29, %c0_30], %34 {strides = array<i32>} : memref<8x128xf32, #tpu.memory_space<vmem>>, vector<8x128xf32>,
    } else {
    }
    return
  }
  func.func @transform_0(%arg0: i32, %arg1: i32) -> (i32, i32, i32) {
    %c0_i32 = arith.constant 0 : i32
    %c0_i32_0 = arith.constant 0 : i32
    return %arg0, %arg1, %c0_i32 : i32, i32, i32
  }
  func.func @transform_1(%arg0: i32, %arg1: i32) -> (i32, i32, i32) {
    %c0_i32 = arith.constant 0 : i32
    %c0_i32_0 = arith.constant 0 : i32
    return %arg0, %c0_i32, %arg1 : i32, i32, i32
  }
  func.func @transform_2(%arg0: i32, %arg1: i32) -> (i32, i32) {
    %c0_i32 = arith.constant 0 : i32
    %c0_i32_0 = arith.constant 0 : i32
    return %arg0, %c0_i32 : i32, i32
  }
  func.func @transform_3(%arg0: i32, %arg1: i32) -> (i32, i32) {
    %c0_i32 = arith.constant 0 : i32
    %c0_i32_0 = arith.constant 0 : i32
    %c0_i32_1 = arith.constant 0 : i32
    return %c0_i32, %c0_i32_0 : i32, i32
  }
  func.func @transform_4(%arg0: i32, %arg1: i32) -> (i32, i32) {
    %c0_i32 = arith.constant 0 : i32
    %c0_i32_0 = arith.constant 0 : i32
    %c0_i32_1 = arith.constant 0 : i32
    return %c0_i32, %c0_i32_0 : i32, i32
  }
  func.func @transform_5(%arg0: i32, %arg1: i32) -> (i32, i32) {
    %c0_i32 = arith.constant 0 : i32
    %c0_i32_0 = arith.constant 0 : i32
    %c0_i32_1 = arith.constant 0 : i32
    return %c0_i32, %c0_i32_0 : i32, i32
  }
  func.func @transform_6(%arg0: i32, %arg1: i32) -> (i32, i32) {
    %c0_i32 = arith.constant 0 : i32
    %c0_i32_0 = arith.constant 0 : i32
    %c0_i32_1 = arith.constant 0 : i32
    return %c0_i32, %c0_i32_0 : i32, i32
  }
  func.func @transform_7(%arg0: i32, %arg1: i32) -> (i32, i32) {
    %c0_i32 = arith.constant 0 : i32
    %c0_i32_0 = arith.constant 0 : i32
    return %arg0, %c0_i32 : i32, i32
  }
  func.func @transform_8(%arg0: i32, %arg1: i32) -> (i32, i32) {
    %c0_i32 = arith.constant 0 : i32
    %c0_i32_0 = arith.constant 0 : i32
    return %arg0, %c0_i32 : i32, i32
  }
}

</mosaic_0001>

<llo_original>
// kernel: tpu_custom_call.1
$region0: #{tpu_custom_call.1}
  #allocation0 [shape = 'u32[]', space=smem, size = 0x4, offset = 0x4, fixed_abs, tag = 'smem constant byte address 0x4 - core index']
  #allocation1 [shape = 'u32[72,128]{1,0:T(1,128)}', space=vmem, size = 0x9000, scoped, tag = 'internal scratch']
  #allocation2 [shape = 'f32[8,768]{1,0:T(8,128)}', space=vmem, size = 0x6000, scoped, tag = 'scratch operand']
  %s0 = inlined_call_operand.hbm [shape: bf16[8,8,768], index: 0, kind: input, shape index: {}]
  %s1 = inlined_call_operand.vmem [shape: bf16[8,1,8], index: 1, kind: input, shape index: {}]
  %s2 = inlined_call_operand.vmem [shape: f32[8,1], index: 2, kind: input, shape index: {}]
  %s3 = inlined_call_operand.hbm [shape: bf16[768,384], index: 3, kind: input, shape index: {}]
  %s4 = inlined_call_operand.vmem [shape: f32[1,384], index: 4, kind: input, shape index: {}]
  %s5 = inlined_call_operand.hbm [shape: bf16[128,128], index: 5, kind: input, shape index: {}]
  %s6 = inlined_call_operand.vmem [shape: f32[1,128], index: 6, kind: input, shape index: {}]
  %s7 = inlined_call_operand.hbm [shape: f32[8,128], index: 7, kind: output, shape index: {0}]
  %s8 = inlined_call_operand.hbm [shape: f32[8,256], index: 8, kind: output, shape index: {1}]
  %9 = xla_tuple %s7, %s8
  %s10 = sld [smem:[#allocation0]]
  $region66: #{tpu_custom_call.1} parent=0
    _
  %s12 = ssub.s32 1, %s10
  %s13 = scalar_select 0, %s12, %s10
  $region1: #{tpu_custom_call.1} parent=0
    #allocation3 [shape = 'u8[98304]{0}', space=vmem, size = 0x18000, scoped, tag = 'input window, operand 0, single buffered']
    #allocation4 [shape = 's32[1]{0}', space=sflag, size = 0x4, scoped, tag = 'scoped memory for tpu_custom_call.1']
    #allocation5 [shape = 's32[1]{0}', space=sflag, size = 0x4, scoped, tag = 'scoped memory for tpu_custom_call.1']
    #allocation6 [shape = 'u8[589824]{0}', space=vmem, size = 0x90000, scoped, tag = 'input window, operand 3, single buffered']
    #allocation7 [shape = 's32[1]{0}', space=sflag, size = 0x4, scoped, tag = 'scoped memory for tpu_custom_call.1']
    #allocation8 [shape = 'u8[32768]{0}', space=vmem, size = 0x8000, scoped, tag = 'input window, operand 5, single buffered']
    #allocation9 [shape = 'u8[4096]{0}', space=vmem, size = 0x1000, scoped, tag = 'output window, operand 0, single buffered']
    #allocation10 [shape = 'u8[8192]{0}', space=vmem, size = 0x2000, scoped, tag = 'output window, operand 1, single buffered']
    #allocation11 [shape = 's32[1]{0}', space=sflag, size = 0x4, scoped, tag = 'scoped memory for tpu_custom_call.1']
    %14 = vsyncpa [#allocation4], 0
    %15 = vsyncpa [#allocation7], 0
    %16 = vsyncpa [#allocation5], 0
    %17 = vsyncpa [#allocation11], 0
    // Predicated region
    $region2: #{tpu_custom_call.1} parent=1 // pred_check
      _
    $region3: #{tpu_custom_call.1} parent=1 // pred_check_branch
      %19 = sbr.rel (0) target = $region5
    $region4: #{tpu_custom_call.1} parent=1 // pred_region
      %21 = vsyncadd [#allocation4], 0
      %s22 = sshll.u32 %s0, 4
      %s23 = int_to_ptr.hbm [resolvable:$true] %s22
      %s24 = sshll.u32 [#allocation3], 4
      %s25 = int_to_ptr.vmem [resolvable:$true] %s24
      %30 = dma.hbm_to_vmem [thread:$0]  %s23, 3072, %s25, [#allocation4], 384, 384, 24
    $region5: #{tpu_custom_call.1} parent=1 // pred_fallthru
      _
    // Predicated region
    $region6: #{tpu_custom_call.1} parent=1 // pred_check
      _
    $region7: #{tpu_custom_call.1} parent=1 // pred_check_branch
      %32 = sbr.rel (0) target = $region9
    $region8: #{tpu_custom_call.1} parent=1 // pred_region
      _
    $region9: #{tpu_custom_call.1} parent=1 // pred_fallthru
      _
    // Predicated region
    $region10: #{tpu_custom_call.1} parent=1 // pred_check
      _
    $region11: #{tpu_custom_call.1} parent=1 // pred_check_branch
      %34 = sbr.rel (0) target = $region13
    $region12: #{tpu_custom_call.1} parent=1 // pred_region
      _
    $region13: #{tpu_custom_call.1} parent=1 // pred_fallthru
      _
    // Predicated region
    $region14: #{tpu_custom_call.1} parent=1 // pred_check
      _
    $region15: #{tpu_custom_call.1} parent=1 // pred_check_branch
      %36 = sbr.rel (0) target = $region17
    $region16: #{tpu_custom_call.1} parent=1 // pred_region
      %38 = vsyncadd [#allocation7], 0
      %s39 = sshll.u32 %s3, 4
      %s40 = int_to_ptr.hbm [resolvable:$true] %s39
      %s41 = sshll.u32 [#allocation6], 4
      %s42 = int_to_ptr.vmem [resolvable:$true] %s41
      %47 = dma.hbm_to_vmem [thread:$0]  %s40, 18432, %s42, [#allocation7], 192, 192, 12
    $region17: #{tpu_custom_call.1} parent=1 // pred_fallthru
      _
    // Predicated region
    $region18: #{tpu_custom_call.1} parent=1 // pred_check
      _
    $region19: #{tpu_custom_call.1} parent=1 // pred_check_branch
      %49 = sbr.rel (0) target = $region21
    $region20: #{tpu_custom_call.1} parent=1 // pred_region
      _
    $region21: #{tpu_custom_call.1} parent=1 // pred_fallthru
      _
    // Predicated region
    $region22: #{tpu_custom_call.1} parent=1 // pred_check
      _
    $region23: #{tpu_custom_call.1} parent=1 // pred_check_branch
      %51 = sbr.rel (0) target = $region25
    $region24: #{tpu_custom_call.1} parent=1 // pred_region
      %53 = vsyncadd [#allocation7], 0
      %s54 = sshll.u32 %s5, 4
      %s55 = int_to_ptr.hbm [resolvable:$true] %s54
      %s56 = sshll.u32 [#allocation8], 4
      %s57 = int_to_ptr.vmem [resolvable:$true] %s56
      %62 = dma.hbm_to_vmem [thread:$0]  %s55, 1024, %s57, [#allocation7], 64, 64, 4
    $region25: #{tpu_custom_call.1} parent=1 // pred_fallthru
      _
    // Predicated region
    $region26: #{tpu_custom_call.1} parent=1 // pred_check
      _
    $region27: #{tpu_custom_call.1} parent=1 // pred_check_branch
      %64 = sbr.rel (0) target = $region29
    $region28: #{tpu_custom_call.1} parent=1 // pred_region
      _
    $region29: #{tpu_custom_call.1} parent=1 // pred_fallthru
      _
    // Predicated region
    $region30: #{tpu_custom_call.1} parent=1 // pred_check
      _
    $region31: #{tpu_custom_call.1} parent=1 // pred_check_branch
      %66 = sbr.rel (0) target = $region33
    $region32: #{tpu_custom_call.1} parent=1 // pred_region
      %68 = dma.done [#allocation4], 3072
    $region33: #{tpu_custom_call.1} parent=1 // pred_fallthru
      _
    // Predicated region
    $region34: #{tpu_custom_call.1} parent=1 // pred_check
      _
    $region35: #{tpu_custom_call.1} parent=1 // pred_check_branch
      %70 = sbr.rel (0) target = $region37
    $region36: #{tpu_custom_call.1} parent=1 // pred_region
      %72 = dma.done [#allocation7], 18432
    $region37: #{tpu_custom_call.1} parent=1 // pred_fallthru
      _
    // Predicated region
    $region38: #{tpu_custom_call.1} parent=1 // pred_check
      _
    $region39: #{tpu_custom_call.1} parent=1 // pred_check_branch
      %74 = sbr.rel (0) target = $region41
    $region40: #{tpu_custom_call.1} parent=1 // pred_region
      %76 = dma.done [#allocation7], 1024
    $region41: #{tpu_custom_call.1} parent=1 // pred_fallthru
      _
    %p78 = scmp.eq.s32.totalorder 0, 0
    // Predicated region
    $region42: #{tpu_custom_call.1} parent=1 // pred_check
      %p79 = pneg %p78
    $region43: #{tpu_custom_call.1} parent=1 // pred_check_branch
      %81 = sbr.rel (%p79) target = $region45
    $region44: #{tpu_custom_call.1} parent=1 // pred_region
      %82 = vst [vmem:[#allocation2] sm:$0xff] 0.0
      %83 = vst [vmem:[#allocation2 + $0x8] sm:$0xff] 0.0
      %84 = vst [vmem:[#allocation2 + $0x10] sm:$0xff] 0.0
      %85 = vst [vmem:[#allocation2 + $0x18] sm:$0xff] 0.0
      %86 = vst [vmem:[#allocation2 + $0x20] sm:$0xff] 0.0
      %87 = vst [vmem:[#allocation2 + $0x28] sm:$0xff] 0.0
    $region45: #{tpu_custom_call.1} parent=1 // pred_fallthru
      _
    %v88 = vld [vmem:[%s1] sm:$0x1]
    %v89 = vld [vmem:[%s1 + $0x1] sm:$0x1]
    %v90 = vld [vmem:[%s1 + $0x2] sm:$0x1]
    %v91 = vld [vmem:[%s1 + $0x3] sm:$0x1]
    %v92 = vld [vmem:[%s1 + $0x4] sm:$0x1]
    %v93 = vld [vmem:[%s1 + $0x5] sm:$0x1]
    %v94 = vld [vmem:[%s1 + $0x6] sm:$0x1]
    %v95 = vld [vmem:[%s1 + $0x7] sm:$0x1]
    %v96 = vld [vmem:[#allocation3] sm:$0xff]
    %v97 = vld [vmem:[#allocation3 + $0x8] sm:$0xff]
    %v98 = vld [vmem:[#allocation3 + $0x10] sm:$0xff]
    %v99 = vld [vmem:[#allocation3 + $0x18] sm:$0xff]
    %v100 = vld [vmem:[#allocation3 + $0x20] sm:$0xff]
    %v101 = vld [vmem:[#allocation3 + $0x28] sm:$0xff]
    %v102 = vld [vmem:[#allocation3 + $0x30] sm:$0xff]
    %v103 = vld [vmem:[#allocation3 + $0x38] sm:$0xff]
    %v104 = vld [vmem:[#allocation3 + $0x40] sm:$0xff]
    %v105 = vld [vmem:[#allocation3 + $0x48] sm:$0xff]
    %v106 = vld [vmem:[#allocation3 + $0x50] sm:$0xff]
    %v107 = vld [vmem:[#allocation3 + $0x58] sm:$0xff]
    %v108 = vld [vmem:[#allocation3 + $0x60] sm:$0xff]
    %v109 = vld [vmem:[#allocation3 + $0x68] sm:$0xff]
    %v110 = vld [vmem:[#allocation3 + $0x70] sm:$0xff]
    %v111 = vld [vmem:[#allocation3 + $0x78] sm:$0xff]
    %v112 = vld [vmem:[#allocation3 + $0x80] sm:$0xff]
    %v113 = vld [vmem:[#allocation3 + $0x88] sm:$0xff]
    %v114 = vld [vmem:[#allocation3 + $0x90] sm:$0xff]
    %v115 = vld [vmem:[#allocation3 + $0x98] sm:$0xff]
    %v116 = vld [vmem:[#allocation3 + $0xa0] sm:$0xff]
    %v117 = vld [vmem:[#allocation3 + $0xa8] sm:$0xff]
    %v118 = vld [vmem:[#allocation3 + $0xb0] sm:$0xff]
    %v119 = vld [vmem:[#allocation3 + $0xb8] sm:$0xff]
    %v123 = vunpack.c.l.b16 %v96
    %v124 = vunpack.c.h.b16 %v96
    %v125 = vunpack.c.l.b16 %v97
    %v126 = vunpack.c.h.b16 %v97
    %v127 = vunpack.c.l.b16 %v98
    %v128 = vunpack.c.h.b16 %v98
    %v129 = vpack.c.b16 %v123, %v123
    %v130 = vpack.c.b16 %v124, %v124
    %v131 = vpack.c.b16 %v125, %v125
    %v132 = vpack.c.b16 %v126, %v126
    %v133 = vpack.c.b16 %v127, %v127
    %v134 = vpack.c.b16 %v128, %v128
    %vm135 = vcmask 64512
    %v137 = vsel %vm135, %v88, 0
    %vm139 = vcmask 1043456
    %v141 = vsel %vm139, %v129, 0
    %v144 = vsel %vm139, %v130, 0
    %v147 = vsel %vm139, %v131, 0
    %v150 = vsel %vm139, %v132, 0
    %v153 = vsel %vm139, %v133, 0
    %v156 = vsel %vm139, %v134, 0
    %158 = vmatpush.bf16.msra.mxu0 0
    %159 = vmatpush.bf16.msra.mxu0 0
    %160 = vmatpush.bf16.msra.mxu0 0
    %161 = vmatpush.bf16.msra.mxu0 0
    %162 = vmatpush.bf16.msra.mxu0 0
    %163 = vmatpush.bf16.msra.mxu0 0
    %164 = vmatpush.bf16.msra.mxu0 0
    %165 = vmatpush.bf16.msra.mxu0 %v141
    %166 = vmatmul.bf16.gmra.mxu0 %v137
    %v167 = vpop.f32.mrf.mxu0
    %v168 = vadd.f32 0.0, %v167
    %v169 = vpop.f32.mrf.mxu0
    %170 = vdwg.mxu0
    %171 = vmatpush.bf16.msra.mxu0 0
    %172 = vmatpush.bf16.msra.mxu0 0
    %173 = vmatpush.bf16.msra.mxu0 0
    %174 = vmatpush.bf16.msra.mxu0 0
    %175 = vmatpush.bf16.msra.mxu0 0
    %176 = vmatpush.bf16.msra.mxu0 0
    %177 = vmatpush.bf16.msra.mxu0 0
    %178 = vmatpush.bf16.msra.mxu0 %v144
    %179 = vmatmul.bf16.gmra.mxu0 %v137
    %v180 = vpop.f32.mrf.mxu0
    %v181 = vadd.f32 0.0, %v180
    %v182 = vpop.f32.mrf.mxu0
    %183 = vdwg.mxu0
    %184 = vmatpush.bf16.msra.mxu0 0
    %185 = vmatpush.bf16.msra.mxu0 0
    %186 = vmatpush.bf16.msra.mxu0 0
    %187 = vmatpush.bf16.msra.mxu0 0
    %188 = vmatpush.bf16.msra.mxu0 0
    %189 = vmatpush.bf16.msra.mxu0 0
    %190 = vmatpush.bf16.msra.mxu0 0
    %191 = vmatpush.bf16.msra.mxu0 %v147
    %192 = vmatmul.bf16.gmra.mxu0 %v137
    %v193 = vpop.f32.mrf.mxu0
    %v194 = vadd.f32 0.0, %v193
    %v195 = vpop.f32.mrf.mxu0
    %196 = vdwg.mxu0
    %197 = vmatpush.bf16.msra.mxu0 0
    %198 = vmatpush.bf16.msra.mxu0 0
    %199 = vmatpush.bf16.msra.mxu0 0
    %200 = vmatpush.bf16.msra.mxu0 0
    %201 = vmatpush.bf16.msra.mxu0 0
    %202 = vmatpush.bf16.msra.mxu0 0
    %203 = vmatpush.bf16.msra.mxu0 0
    %204 = vmatpush.bf16.msra.mxu0 %v150
    %205 = vmatmul.bf16.gmra.mxu0 %v137
    %v206 = vpop.f32.mrf.mxu0
    %v207 = vadd.f32 0.0, %v206
    %v208 = vpop.f32.mrf.mxu0
    %209 = vdwg.mxu0
    %210 = vmatpush.bf16.msra.mxu0 0
    %211 = vmatpush.bf16.msra.mxu0 0
    %212 = vmatpush.bf16.msra.mxu0 0
    %213 = vmatpush.bf16.msra.mxu0 0
    %214 = vmatpush.bf16.msra.mxu0 0
    %215 = vmatpush.bf16.msra.mxu0 0
    %216 = vmatpush.bf16.msra.mxu0 0
    %217 = vmatpush.bf16.msra.mxu0 %v153
    %218 = vmatmul.bf16.gmra.mxu0 %v137
    %v219 = vpop.f32.mrf.mxu0
    %v220 = vadd.f32 0.0, %v219
    %v221 = vpop.f32.mrf.mxu0
    %222 = vdwg.mxu0
    %223 = vmatpush.bf16.msra.mxu0 0
    %224 = vmatpush.bf16.msra.mxu0 0
    %225 = vmatpush.bf16.msra.mxu0 0
    %226 = vmatpush.bf16.msra.mxu0 0
    %227 = vmatpush.bf16.msra.mxu0 0
    %228 = vmatpush.bf16.msra.mxu0 0
    %229 = vmatpush.bf16.msra.mxu0 0
    %230 = vmatpush.bf16.msra.mxu0 %v156
    %231 = vmatmul.bf16.gmra.mxu0 %v137
    %v232 = vpop.f32.mrf.mxu0
    %v233 = vadd.f32 0.0, %v232
    %v234 = vpop.f32.mrf.mxu0
    %235 = vdwg.mxu0
    %v239 = vunpack.c.l.b16 %v99
    %v240 = vunpack.c.h.b16 %v99
    %v241 = vunpack.c.l.b16 %v100
    %v242 = vunpack.c.h.b16 %v100
    %v243 = vunpack.c.l.b16 %v101
    %v244 = vunpack.c.h.b16 %v101
    %v245 = vpack.c.b16 %v239, %v239
    %v246 = vpack.c.b16 %v240, %v240
    %v247 = vpack.c.b16 %v241, %v241
    %v248 = vpack.c.b16 %v242, %v242
    %v249 = vpack.c.b16 %v243, %v243
    %v250 = vpack.c.b16 %v244, %v244
    %v252 = vsel %vm135, %v89, 0
    %v255 = vsel %vm139, %v245, 0
    %v258 = vsel %vm139, %v246, 0
    %v261 = vsel %vm139, %v247, 0
    %v264 = vsel %vm139, %v248, 0
    %v267 = vsel %vm139, %v249, 0
    %v270 = vsel %vm139, %v250, 0
    %272 = vmatpush.bf16.msra.mxu0 0
    %273 = vmatpush.bf16.msra.mxu0 0
    %274 = vmatpush.bf16.msra.mxu0 0
    %275 = vmatpush.bf16.msra.mxu0 0
    %276 = vmatpush.bf16.msra.mxu0 0
    %277 = vmatpush.bf16.msra.mxu0 0
    %278 = vmatpush.bf16.msra.mxu0 0
    %279 = vmatpush.bf16.msra.mxu0 %v255
    %280 = vmatmul.bf16.gmra.mxu0 %v252
    %v281 = vpop.f32.mrf.mxu0
    %v282 = vadd.f32 0.0, %v281
    %v283 = vpop.f32.mrf.mxu0
    %284 = vdwg.mxu0
    %285 = vmatpush.bf16.msra.mxu0 0
    %286 = vmatpush.bf16.msra.mxu0 0
    %287 = vmatpush.bf16.msra.mxu0 0
    %288 = vmatpush.bf16.msra.mxu0 0
    %289 = vmatpush.bf16.msra.mxu0 0
    %290 = vmatpush.bf16.msra.mxu0 0
    %291 = vmatpush.bf16.msra.mxu0 0
    %292 = vmatpush.bf16.msra.mxu0 %v258
    %293 = vmatmul.bf16.gmra.mxu0 %v252
    %v294 = vpop.f32.mrf.mxu0
    %v295 = vadd.f32 0.0, %v294
    %v296 = vpop.f32.mrf.mxu0
    %297 = vdwg.mxu0
    %298 = vmatpush.bf16.msra.mxu0 0
    %299 = vmatpush.bf16.msra.mxu0 0
    %300 = vmatpush.bf16.msra.mxu0 0
    %301 = vmatpush.bf16.msra.mxu0 0
    %302 = vmatpush.bf16.msra.mxu0 0
    %303 = vmatpush.bf16.msra.mxu0 0
    %304 = vmatpush.bf16.msra.mxu0 0
    %305 = vmatpush.bf16.msra.mxu0 %v261
    %306 = vmatmul.bf16.gmra.mxu0 %v252
    %v307 = vpop.f32.mrf.mxu0
    %v308 = vadd.f32 0.0, %v307
    %v309 = vpop.f32.mrf.mxu0
    %310 = vdwg.mxu0
    %311 = vmatpush.bf16.msra.mxu0 0
    %312 = vmatpush.bf16.msra.mxu0 0
    %313 = vmatpush.bf16.msra.mxu0 0
    %314 = vmatpush.bf16.msra.mxu0 0
    %315 = vmatpush.bf16.msra.mxu0 0
    %316 = vmatpush.bf16.msra.mxu0 0
    %317 = vmatpush.bf16.msra.mxu0 0
    %318 = vmatpush.bf16.msra.mxu0 %v264
    %319 = vmatmul.bf16.gmra.mxu0 %v252
    %v320 = vpop.f32.mrf.mxu0
    %v321 = vadd.f32 0.0, %v320
    %v322 = vpop.f32.mrf.mxu0
    %323 = vdwg.mxu0
    %324 = vmatpush.bf16.msra.mxu0 0
    %325 = vmatpush.bf16.msra.mxu0 0
    %326 = vmatpush.bf16.msra.mxu0 0
    %327 = vmatpush.bf16.msra.mxu0 0
    %328 = vmatpush.bf16.msra.mxu0 0
    %329 = vmatpush.bf16.msra.mxu0 0
    %330 = vmatpush.bf16.msra.mxu0 0
    %331 = vmatpush.bf16.msra.mxu0 %v267
    %332 = vmatmul.bf16.gmra.mxu0 %v252
    %v333 = vpop.f32.mrf.mxu0
    %v334 = vadd.f32 0.0, %v333
    %v335 = vpop.f32.mrf.mxu0
    %336 = vdwg.mxu0
    %337 = vmatpush.bf16.msra.mxu0 0
    %338 = vmatpush.bf16.msra.mxu0 0
    %339 = vmatpush.bf16.msra.mxu0 0
    %340 = vmatpush.bf16.msra.mxu0 0
    %341 = vmatpush.bf16.msra.mxu0 0
    %342 = vmatpush.bf16.msra.mxu0 0
    %343 = vmatpush.bf16.msra.mxu0 0
    %344 = vmatpush.bf16.msra.mxu0 %v270
    %345 = vmatmul.bf16.gmra.mxu0 %v252
    %v346 = vpop.f32.mrf.mxu0
    %v347 = vadd.f32 0.0, %v346
    %v348 = vpop.f32.mrf.mxu0
    %349 = vdwg.mxu0
    %v353 = vunpack.c.l.b16 %v102
    %v354 = vunpack.c.h.b16 %v102
    %v355 = vunpack.c.l.b16 %v103
    %v356 = vunpack.c.h.b16 %v103
    %v357 = vunpack.c.l.b16 %v104
    %v358 = vunpack.c.h.b16 %v104
    %v359 = vpack.c.b16 %v353, %v353
    %v360 = vpack.c.b16 %v354, %v354
    %v361 = vpack.c.b16 %v355, %v355
    %v362 = vpack.c.b16 %v356, %v356
    %v363 = vpack.c.b16 %v357, %v357
    %v364 = vpack.c.b16 %v358, %v358
    %v366 = vsel %vm135, %v90, 0
    %v369 = vsel %vm139, %v359, 0
    %v372 = vsel %vm139, %v360, 0
    %v375 = vsel %vm139, %v361, 0
    %v378 = vsel %vm139, %v362, 0
    %v381 = vsel %vm139, %v363, 0
    %v384 = vsel %vm139, %v364, 0
    %386 = vmatpush.bf16.msra.mxu0 0
    %387 = vmatpush.bf16.msra.mxu0 0
    %388 = vmatpush.bf16.msra.mxu0 0
    %389 = vmatpush.bf16.msra.mxu0 0
    %390 = vmatpush.bf16.msra.mxu0 0
    %391 = vmatpush.bf16.msra.mxu0 0
    %392 = vmatpush.bf16.msra.mxu0 0
    %393 = vmatpush.bf16.msra.mxu0 %v369
    %394 = vmatmul.bf16.gmra.mxu0 %v366
    %v395 = vpop.f32.mrf.mxu0
    %v396 = vadd.f32 0.0, %v395
    %v397 = vpop.f32.mrf.mxu0
    %398 = vdwg.mxu0
    %399 = vmatpush.bf16.msra.mxu0 0
    %400 = vmatpush.bf16.msra.mxu0 0
    %401 = vmatpush.bf16.msra.mxu0 0
    %402 = vmatpush.bf16.msra.mxu0 0
    %403 = vmatpush.bf16.msra.mxu0 0
    %404 = vmatpush.bf16.msra.mxu0 0
    %405 = vmatpush.bf16.msra.mxu0 0
    %406 = vmatpush.bf16.msra.mxu0 %v372
    %407 = vmatmul.bf16.gmra.mxu0 %v366
    %v408 = vpop.f32.mrf.mxu0
    %v409 = vadd.f32 0.0, %v408
    %v410 = vpop.f32.mrf.mxu0
    %411 = vdwg.mxu0
    %412 = vmatpush.bf16.msra.mxu0 0
    %413 = vmatpush.bf16.msra.mxu0 0
    %414 = vmatpush.bf16.msra.mxu0 0
    %415 = vmatpush.bf16.msra.mxu0 0
    %416 = vmatpush.bf16.msra.mxu0 0
    %417 = vmatpush.bf16.msra.mxu0 0
    %418 = vmatpush.bf16.msra.mxu0 0
    %419 = vmatpush.bf16.msra.mxu0 %v375
    %420 = vmatmul.bf16.gmra.mxu0 %v366
    %v421 = vpop.f32.mrf.mxu0
    %v422 = vadd.f32 0.0, %v421
    %v423 = vpop.f32.mrf.mxu0
    %424 = vdwg.mxu0
    %425 = vmatpush.bf16.msra.mxu0 0
    %426 = vmatpush.bf16.msra.mxu0 0
    %427 = vmatpush.bf16.msra.mxu0 0
    %428 = vmatpush.bf16.msra.mxu0 0
    %429 = vmatpush.bf16.msra.mxu0 0
    %430 = vmatpush.bf16.msra.mxu0 0
    %431 = vmatpush.bf16.msra.mxu0 0
    %432 = vmatpush.bf16.msra.mxu0 %v378
    %433 = vmatmul.bf16.gmra.mxu0 %v366
    %v434 = vpop.f32.mrf.mxu0
    %v435 = vadd.f32 0.0, %v434
    %v436 = vpop.f32.mrf.mxu0
    %437 = vdwg.mxu0
    %438 = vmatpush.bf16.msra.mxu0 0
    %439 = vmatpush.bf16.msra.mxu0 0
    %440 = vmatpush.bf16.msra.mxu0 0
    %441 = vmatpush.bf16.msra.mxu0 0
    %442 = vmatpush.bf16.msra.mxu0 0
    %443 = vmatpush.bf16.msra.mxu0 0
    %444 = vmatpush.bf16.msra.mxu0 0
    %445 = vmatpush.bf16.msra.mxu0 %v381
    %446 = vmatmul.bf16.gmra.mxu0 %v366
    %v447 = vpop.f32.mrf.mxu0
    %v448 = vadd.f32 0.0, %v447
    %v449 = vpop.f32.mrf.mxu0
    %450 = vdwg.mxu0
    %451 = vmatpush.bf16.msra.mxu0 0
    %452 = vmatpush.bf16.msra.mxu0 0
    %453 = vmatpush.bf16.msra.mxu0 0
    %454 = vmatpush.bf16.msra.mxu0 0
    %455 = vmatpush.bf16.msra.mxu0 0
    %456 = vmatpush.bf16.msra.mxu0 0
    %457 = vmatpush.bf16.msra.mxu0 0
    %458 = vmatpush.bf16.msra.mxu0 %v384
    %459 = vmatmul.bf16.gmra.mxu0 %v366
    %v460 = vpop.f32.mrf.mxu0
    %v461 = vadd.f32 0.0, %v460
    %v462 = vpop.f32.mrf.mxu0
    %463 = vdwg.mxu0
    %v467 = vunpack.c.l.b16 %v105
    %v468 = vunpack.c.h.b16 %v105
    %v469 = vunpack.c.l.b16 %v106
    %v470 = vunpack.c.h.b16 %v106
    %v471 = vunpack.c.l.b16 %v107
    %v472 = vunpack.c.h.b16 %v107
    %v473 = vpack.c.b16 %v467, %v467
    %v474 = vpack.c.b16 %v468, %v468
    %v475 = vpack.c.b16 %v469, %v469
    %v476 = vpack.c.b16 %v470, %v470
    %v477 = vpack.c.b16 %v471, %v471
    %v478 = vpack.c.b16 %v472, %v472
    %v480 = vsel %vm135, %v91, 0
    %v483 = vsel %vm139, %v473, 0
    %v486 = vsel %vm139, %v474, 0
    %v489 = vsel %vm139, %v475, 0
    %v492 = vsel %vm139, %v476, 0
    %v495 = vsel %vm139, %v477, 0
    %v498 = vsel %vm139, %v478, 0
    %500 = vmatpush.bf16.msra.mxu0 0
    %501 = vmatpush.bf16.msra.mxu0 0
    %502 = vmatpush.bf16.msra.mxu0 0
    %503 = vmatpush.bf16.msra.mxu0 0
    %504 = vmatpush.bf16.msra.mxu0 0
    %505 = vmatpush.bf16.msra.mxu0 0
    %506 = vmatpush.bf16.msra.mxu0 0
    %507 = vmatpush.bf16.msra.mxu0 %v483
    %508 = vmatmul.bf16.gmra.mxu0 %v480
    %v509 = vpop.f32.mrf.mxu0
    %v510 = vadd.f32 0.0, %v509
    %v511 = vpop.f32.mrf.mxu0
    %512 = vdwg.mxu0
    %513 = vmatpush.bf16.msra.mxu0 0
    %514 = vmatpush.bf16.msra.mxu0 0
    %515 = vmatpush.bf16.msra.mxu0 0
    %516 = vmatpush.bf16.msra.mxu0 0
    %517 = vmatpush.bf16.msra.mxu0 0
    %518 = vmatpush.bf16.msra.mxu0 0
    %519 = vmatpush.bf16.msra.mxu0 0
    %520 = vmatpush.bf16.msra.mxu0 %v486
    %521 = vmatmul.bf16.gmra.mxu0 %v480
    %v522 = vpop.f32.mrf.mxu0
    %v523 = vadd.f32 0.0, %v522
    %v524 = vpop.f32.mrf.mxu0
    %525 = vdwg.mxu0
    %526 = vmatpush.bf16.msra.mxu0 0
    %527 = vmatpush.bf16.msra.mxu0 0
    %528 = vmatpush.bf16.msra.mxu0 0
    %529 = vmatpush.bf16.msra.mxu0 0
    %530 = vmatpush.bf16.msra.mxu0 0
    %531 = vmatpush.bf16.msra.mxu0 0
    %532 = vmatpush.bf16.msra.mxu0 0
    %533 = vmatpush.bf16.msra.mxu0 %v489
    %534 = vmatmul.bf16.gmra.mxu0 %v480
    %v535 = vpop.f32.mrf.mxu0
    %v536 = vadd.f32 0.0, %v535
    %v537 = vpop.f32.mrf.mxu0
    %538 = vdwg.mxu0
    %539 = vmatpush.bf16.msra.mxu0 0
    %540 = vmatpush.bf16.msra.mxu0 0
    %541 = vmatpush.bf16.msra.mxu0 0
    %542 = vmatpush.bf16.msra.mxu0 0
    %543 = vmatpush.bf16.msra.mxu0 0
    %544 = vmatpush.bf16.msra.mxu0 0
    %545 = vmatpush.bf16.msra.mxu0 0
    %546 = vmatpush.bf16.msra.mxu0 %v492
    %547 = vmatmul.bf16.gmra.mxu0 %v480
    %v548 = vpop.f32.mrf.mxu0
    %v549 = vadd.f32 0.0, %v548
    %v550 = vpop.f32.mrf.mxu0
    %551 = vdwg.mxu0
    %552 = vmatpush.bf16.msra.mxu0 0
    %553 = vmatpush.bf16.msra.mxu0 0
    %554 = vmatpush.bf16.msra.mxu0 0
    %555 = vmatpush.bf16.msra.mxu0 0
    %556 = vmatpush.bf16.msra.mxu0 0
    %557 = vmatpush.bf16.msra.mxu0 0
    %558 = vmatpush.bf16.msra.mxu0 0
    %559 = vmatpush.bf16.msra.mxu0 %v495
    %560 = vmatmul.bf16.gmra.mxu0 %v480
    %v561 = vpop.f32.mrf.mxu0
    %v562 = vadd.f32 0.0, %v561
    %v563 = vpop.f32.mrf.mxu0
    %564 = vdwg.mxu0
    %565 = vmatpush.bf16.msra.mxu0 0
    %566 = vmatpush.bf16.msra.mxu0 0
    %567 = vmatpush.bf16.msra.mxu0 0
    %568 = vmatpush.bf16.msra.mxu0 0
    %569 = vmatpush.bf16.msra.mxu0 0
    %570 = vmatpush.bf16.msra.mxu0 0
    %571 = vmatpush.bf16.msra.mxu0 0
    %572 = vmatpush.bf16.msra.mxu0 %v498
    %573 = vmatmul.bf16.gmra.mxu0 %v480
    %v574 = vpop.f32.mrf.mxu0
    %v575 = vadd.f32 0.0, %v574
    %v576 = vpop.f32.mrf.mxu0
    %577 = vdwg.mxu0
    %v581 = vunpack.c.l.b16 %v108
    %v582 = vunpack.c.h.b16 %v108
    %v583 = vunpack.c.l.b16 %v109
    %v584 = vunpack.c.h.b16 %v109
    %v585 = vunpack.c.l.b16 %v110
    %v586 = vunpack.c.h.b16 %v110
    %v587 = vpack.c.b16 %v581, %v581
    %v588 = vpack.c.b16 %v582, %v582
    %v589 = vpack.c.b16 %v583, %v583
    %v590 = vpack.c.b16 %v584, %v584
    %v591 = vpack.c.b16 %v585, %v585
    %v592 = vpack.c.b16 %v586, %v586
    %v594 = vsel %vm135, %v92, 0
    %v597 = vsel %vm139, %v587, 0
    %v600 = vsel %vm139, %v588, 0
    %v603 = vsel %vm139, %v589, 0
    %v606 = vsel %vm139, %v590, 0
    %v609 = vsel %vm139, %v591, 0
    %v612 = vsel %vm139, %v592, 0
    %614 = vmatpush.bf16.msra.mxu0 0
    %615 = vmatpush.bf16.msra.mxu0 0
    %616 = vmatpush.bf16.msra.mxu0 0
    %617 = vmatpush.bf16.msra.mxu0 0
    %618 = vmatpush.bf16.msra.mxu0 0
    %619 = vmatpush.bf16.msra.mxu0 0
    %620 = vmatpush.bf16.msra.mxu0 0
    %621 = vmatpush.bf16.msra.mxu0 %v597
    %622 = vmatmul.bf16.gmra.mxu0 %v594
    %v623 = vpop.f32.mrf.mxu0
    %v624 = vadd.f32 0.0, %v623
    %v625 = vpop.f32.mrf.mxu0
    %626 = vdwg.mxu0
    %627 = vmatpush.bf16.msra.mxu0 0
    %628 = vmatpush.bf16.msra.mxu0 0
    %629 = vmatpush.bf16.msra.mxu0 0
    %630 = vmatpush.bf16.msra.mxu0 0
    %631 = vmatpush.bf16.msra.mxu0 0
    %632 = vmatpush.bf16.msra.mxu0 0
    %633 = vmatpush.bf16.msra.mxu0 0
    %634 = vmatpush.bf16.msra.mxu0 %v600
    %635 = vmatmul.bf16.gmra.mxu0 %v594
    %v636 = vpop.f32.mrf.mxu0
    %v637 = vadd.f32 0.0, %v636
    %v638 = vpop.f32.mrf.mxu0
    %639 = vdwg.mxu0
    %640 = vmatpush.bf16.msra.mxu0 0
    %641 = vmatpush.bf16.msra.mxu0 0
    %642 = vmatpush.bf16.msra.mxu0 0
    %643 = vmatpush.bf16.msra.mxu0 0
    %644 = vmatpush.bf16.msra.mxu0 0
    %645 = vmatpush.bf16.msra.mxu0 0
    %646 = vmatpush.bf16.msra.mxu0 0
    %647 = vmatpush.bf16.msra.mxu0 %v603
    %648 = vmatmul.bf16.gmra.mxu0 %v594
    %v649 = vpop.f32.mrf.mxu0
    %v650 = vadd.f32 0.0, %v649
    %v651 = vpop.f32.mrf.mxu0
    %652 = vdwg.mxu0
    %653 = vmatpush.bf16.msra.mxu0 0
    %654 = vmatpush.bf16.msra.mxu0 0
    %655 = vmatpush.bf16.msra.mxu0 0
    %656 = vmatpush.bf16.msra.mxu0 0
    %657 = vmatpush.bf16.msra.mxu0 0
    %658 = vmatpush.bf16.msra.mxu0 0
    %659 = vmatpush.bf16.msra.mxu0 0
    %660 = vmatpush.bf16.msra.mxu0 %v606
    %661 = vmatmul.bf16.gmra.mxu0 %v594
    %v662 = vpop.f32.mrf.mxu0
    %v663 = vadd.f32 0.0, %v662
    %v664 = vpop.f32.mrf.mxu0
    %665 = vdwg.mxu0
    %666 = vmatpush.bf16.msra.mxu0 0
    %667 = vmatpush.bf16.msra.mxu0 0
    %668 = vmatpush.bf16.msra.mxu0 0
    %669 = vmatpush.bf16.msra.mxu0 0
    %670 = vmatpush.bf16.msra.mxu0 0
    %671 = vmatpush.bf16.msra.mxu0 0
    %672 = vmatpush.bf16.msra.mxu0 0
    %673 = vmatpush.bf16.msra.mxu0 %v609
    %674 = vmatmul.bf16.gmra.mxu0 %v594
    %v675 = vpop.f32.mrf.mxu0
    %v676 = vadd.f32 0.0, %v675
    %v677 = vpop.f32.mrf.mxu0
    %678 = vdwg.mxu0
    %679 = vmatpush.bf16.msra.mxu0 0
    %680 = vmatpush.bf16.msra.mxu0 0
    %681 = vmatpush.bf16.msra.mxu0 0
    %682 = vmatpush.bf16.msra.mxu0 0
    %683 = vmatpush.bf16.msra.mxu0 0
    %684 = vmatpush.bf16.msra.mxu0 0
    %685 = vmatpush.bf16.msra.mxu0 0
    %686 = vmatpush.bf16.msra.mxu0 %v612
    %687 = vmatmul.bf16.gmra.mxu0 %v594
    %v688 = vpop.f32.mrf.mxu0
    %v689 = vadd.f32 0.0, %v688
    %v690 = vpop.f32.mrf.mxu0
    %691 = vdwg.mxu0
    %v695 = vunpack.c.l.b16 %v111
    %v696 = vunpack.c.h.b16 %v111
    %v697 = vunpack.c.l.b16 %v112
    %v698 = vunpack.c.h.b16 %v112
    %v699 = vunpack.c.l.b16 %v113
    %v700 = vunpack.c.h.b16 %v113
    %v701 = vpack.c.b16 %v695, %v695
    %v702 = vpack.c.b16 %v696, %v696
    %v703 = vpack.c.b16 %v697, %v697
    %v704 = vpack.c.b16 %v698, %v698
    %v705 = vpack.c.b16 %v699, %v699
    %v706 = vpack.c.b16 %v700, %v700
    %v708 = vsel %vm135, %v93, 0
    %v711 = vsel %vm139, %v701, 0
    %v714 = vsel %vm139, %v702, 0
    %v717 = vsel %vm139, %v703, 0
    %v720 = vsel %vm139, %v704, 0
    %v723 = vsel %vm139, %v705, 0
    %v726 = vsel %vm139, %v706, 0
    %728 = vmatpush.bf16.msra.mxu0 0
    %729 = vmatpush.bf16.msra.mxu0 0
    %730 = vmatpush.bf16.msra.mxu0 0
    %731 = vmatpush.bf16.msra.mxu0 0
    %732 = vmatpush.bf16.msra.mxu0 0
    %733 = vmatpush.bf16.msra.mxu0 0
    %734 = vmatpush.bf16.msra.mxu0 0
    %735 = vmatpush.bf16.msra.mxu0 %v711
    %736 = vmatmul.bf16.gmra.mxu0 %v708
    %v737 = vpop.f32.mrf.mxu0
    %v738 = vadd.f32 0.0, %v737
    %v739 = vpop.f32.mrf.mxu0
    %740 = vdwg.mxu0
    %741 = vmatpush.bf16.msra.mxu0 0
    %742 = vmatpush.bf16.msra.mxu0 0
    %743 = vmatpush.bf16.msra.mxu0 0
    %744 = vmatpush.bf16.msra.mxu0 0
    %745 = vmatpush.bf16.msra.mxu0 0
    %746 = vmatpush.bf16.msra.mxu0 0
    %747 = vmatpush.bf16.msra.mxu0 0
    %748 = vmatpush.bf16.msra.mxu0 %v714
    %749 = vmatmul.bf16.gmra.mxu0 %v708
    %v750 = vpop.f32.mrf.mxu0
    %v751 = vadd.f32 0.0, %v750
    %v752 = vpop.f32.mrf.mxu0
    %753 = vdwg.mxu0
    %754 = vmatpush.bf16.msra.mxu0 0
    %755 = vmatpush.bf16.msra.mxu0 0
    %756 = vmatpush.bf16.msra.mxu0 0
    %757 = vmatpush.bf16.msra.mxu0 0
    %758 = vmatpush.bf16.msra.mxu0 0
    %759 = vmatpush.bf16.msra.mxu0 0
    %760 = vmatpush.bf16.msra.mxu0 0
    %761 = vmatpush.bf16.msra.mxu0 %v717
    %762 = vmatmul.bf16.gmra.mxu0 %v708
    %v763 = vpop.f32.mrf.mxu0
    %v764 = vadd.f32 0.0, %v763
    %v765 = vpop.f32.mrf.mxu0
    %766 = vdwg.mxu0
    %767 = vmatpush.bf16.msra.mxu0 0
    %768 = vmatpush.bf16.msra.mxu0 0
    %769 = vmatpush.bf16.msra.mxu0 0
    %770 = vmatpush.bf16.msra.mxu0 0
    %771 = vmatpush.bf16.msra.mxu0 0
    %772 = vmatpush.bf16.msra.mxu0 0
    %773 = vmatpush.bf16.msra.mxu0 0
    %774 = vmatpush.bf16.msra.mxu0 %v720
    %775 = vmatmul.bf16.gmra.mxu0 %v708
    %v776 = vpop.f32.mrf.mxu0
    %v777 = vadd.f32 0.0, %v776
    %v778 = vpop.f32.mrf.mxu0
    %779 = vdwg.mxu0
    %780 = vmatpush.bf16.msra.mxu0 0
    %781 = vmatpush.bf16.msra.mxu0 0
    %782 = vmatpush.bf16.msra.mxu0 0
    %783 = vmatpush.bf16.msra.mxu0 0
    %784 = vmatpush.bf16.msra.mxu0 0
    %785 = vmatpush.bf16.msra.mxu0 0
    %786 = vmatpush.bf16.msra.mxu0 0
    %787 = vmatpush.bf16.msra.mxu0 %v723
    %788 = vmatmul.bf16.gmra.mxu0 %v708
    %v789 = vpop.f32.mrf.mxu0
    %v790 = vadd.f32 0.0, %v789
    %v791 = vpop.f32.mrf.mxu0
    %792 = vdwg.mxu0
    %793 = vmatpush.bf16.msra.mxu0 0
    %794 = vmatpush.bf16.msra.mxu0 0
    %795 = vmatpush.bf16.msra.mxu0 0
    %796 = vmatpush.bf16.msra.mxu0 0
    %797 = vmatpush.bf16.msra.mxu0 0
    %798 = vmatpush.bf16.msra.mxu0 0
    %799 = vmatpush.bf16.msra.mxu0 0
    %800 = vmatpush.bf16.msra.mxu0 %v726
    %801 = vmatmul.bf16.gmra.mxu0 %v708
    %v802 = vpop.f32.mrf.mxu0
    %v803 = vadd.f32 0.0, %v802
    %v804 = vpop.f32.mrf.mxu0
    %805 = vdwg.mxu0
    %v809 = vunpack.c.l.b16 %v114
    %v810 = vunpack.c.h.b16 %v114
    %v811 = vunpack.c.l.b16 %v115
    %v812 = vunpack.c.h.b16 %v115
    %v813 = vunpack.c.l.b16 %v116
    %v814 = vunpack.c.h.b16 %v116
    %v815 = vpack.c.b16 %v809, %v809
    %v816 = vpack.c.b16 %v810, %v810
    %v817 = vpack.c.b16 %v811, %v811
    %v818 = vpack.c.b16 %v812, %v812
    %v819 = vpack.c.b16 %v813, %v813
    %v820 = vpack.c.b16 %v814, %v814
    %v822 = vsel %vm135, %v94, 0
    %v825 = vsel %vm139, %v815, 0
    %v828 = vsel %vm139, %v816, 0
    %v831 = vsel %vm139, %v817, 0
    %v834 = vsel %vm139, %v818, 0
    %v837 = vsel %vm139, %v819, 0
    %v840 = vsel %vm139, %v820, 0
    %842 = vmatpush.bf16.msra.mxu0 0
    %843 = vmatpush.bf16.msra.mxu0 0
    %844 = vmatpush.bf16.msra.mxu0 0
    %845 = vmatpush.bf16.msra.mxu0 0
    %846 = vmatpush.bf16.msra.mxu0 0
    %847 = vmatpush.bf16.msra.mxu0 0
    %848 = vmatpush.bf16.msra.mxu0 0
    %849 = vmatpush.bf16.msra.mxu0 %v825
    %850 = vmatmul.bf16.gmra.mxu0 %v822
    %v851 = vpop.f32.mrf.mxu0
    %v852 = vadd.f32 0.0, %v851
    %v853 = vpop.f32.mrf.mxu0
    %854 = vdwg.mxu0
    %855 = vmatpush.bf16.msra.mxu0 0
    %856 = vmatpush.bf16.msra.mxu0 0
    %857 = vmatpush.bf16.msra.mxu0 0
    %858 = vmatpush.bf16.msra.mxu0 0
    %859 = vmatpush.bf16.msra.mxu0 0
    %860 = vmatpush.bf16.msra.mxu0 0
    %861 = vmatpush.bf16.msra.mxu0 0
    %862 = vmatpush.bf16.msra.mxu0 %v828
    %863 = vmatmul.bf16.gmra.mxu0 %v822
    %v864 = vpop.f32.mrf.mxu0
    %v865 = vadd.f32 0.0, %v864
    %v866 = vpop.f32.mrf.mxu0
    %867 = vdwg.mxu0
    %868 = vmatpush.bf16.msra.mxu0 0
    %869 = vmatpush.bf16.msra.mxu0 0
    %870 = vmatpush.bf16.msra.mxu0 0
    %871 = vmatpush.bf16.msra.mxu0 0
    %872 = vmatpush.bf16.msra.mxu0 0
    %873 = vmatpush.bf16.msra.mxu0 0
    %874 = vmatpush.bf16.msra.mxu0 0
    %875 = vmatpush.bf16.msra.mxu0 %v831
    %876 = vmatmul.bf16.gmra.mxu0 %v822
    %v877 = vpop.f32.mrf.mxu0
    %v878 = vadd.f32 0.0, %v877
    %v879 = vpop.f32.mrf.mxu0
    %880 = vdwg.mxu0
    %881 = vmatpush.bf16.msra.mxu0 0
    %882 = vmatpush.bf16.msra.mxu0 0
    %883 = vmatpush.bf16.msra.mxu0 0
    %884 = vmatpush.bf16.msra.mxu0 0
    %885 = vmatpush.bf16.msra.mxu0 0
    %886 = vmatpush.bf16.msra.mxu0 0
    %887 = vmatpush.bf16.msra.mxu0 0
    %888 = vmatpush.bf16.msra.mxu0 %v834
    %889 = vmatmul.bf16.gmra.mxu0 %v822
    %v890 = vpop.f32.mrf.mxu0
    %v891 = vadd.f32 0.0, %v890
    %v892 = vpop.f32.mrf.mxu0
    %893 = vdwg.mxu0
    %894 = vmatpush.bf16.msra.mxu0 0
    %895 = vmatpush.bf16.msra.mxu0 0
    %896 = vmatpush.bf16.msra.mxu0 0
    %897 = vmatpush.bf16.msra.mxu0 0
    %898 = vmatpush.bf16.msra.mxu0 0
    %899 = vmatpush.bf16.msra.mxu0 0
    %900 = vmatpush.bf16.msra.mxu0 0
    %901 = vmatpush.bf16.msra.mxu0 %v837
    %902 = vmatmul.bf16.gmra.mxu0 %v822
    %v903 = vpop.f32.mrf.mxu0
    %v904 = vadd.f32 0.0, %v903
    %v905 = vpop.f32.mrf.mxu0
    %906 = vdwg.mxu0
    %907 = vmatpush.bf16.msra.mxu0 0
    %908 = vmatpush.bf16.msra.mxu0 0
    %909 = vmatpush.bf16.msra.mxu0 0
    %910 = vmatpush.bf16.msra.mxu0 0
    %911 = vmatpush.bf16.msra.mxu0 0
    %912 = vmatpush.bf16.msra.mxu0 0
    %913 = vmatpush.bf16.msra.mxu0 0
    %914 = vmatpush.bf16.msra.mxu0 %v840
    %915 = vmatmul.bf16.gmra.mxu0 %v822
    %v916 = vpop.f32.mrf.mxu0
    %v917 = vadd.f32 0.0, %v916
    %v918 = vpop.f32.mrf.mxu0
    %919 = vdwg.mxu0
    %v923 = vunpack.c.l.b16 %v117
    %v924 = vunpack.c.h.b16 %v117
    %v925 = vunpack.c.l.b16 %v118
    %v926 = vunpack.c.h.b16 %v118
    %v927 = vunpack.c.l.b16 %v119
    %v928 = vunpack.c.h.b16 %v119
    %v929 = vpack.c.b16 %v923, %v923
    %v930 = vpack.c.b16 %v924, %v924
    %v931 = vpack.c.b16 %v925, %v925
    %v932 = vpack.c.b16 %v926, %v926
    %v933 = vpack.c.b16 %v927, %v927
    %v934 = vpack.c.b16 %v928, %v928
    %v936 = vsel %vm135, %v95, 0
    %v939 = vsel %vm139, %v929, 0
    %v942 = vsel %vm139, %v930, 0
    %v945 = vsel %vm139, %v931, 0
    %v948 = vsel %vm139, %v932, 0
    %v951 = vsel %vm139, %v933, 0
    %v954 = vsel %vm139, %v934, 0
    %956 = vmatpush.bf16.msra.mxu0 0
    %957 = vmatpush.bf16.msra.mxu0 0
    %958 = vmatpush.bf16.msra.mxu0 0
    %959 = vmatpush.bf16.msra.mxu0 0
    %960 = vmatpush.bf16.msra.mxu0 0
    %961 = vmatpush.bf16.msra.mxu0 0
    %962 = vmatpush.bf16.msra.mxu0 0
    %963 = vmatpush.bf16.msra.mxu0 %v939
    %964 = vmatmul.bf16.gmra.mxu0 %v936
    %v965 = vpop.f32.mrf.mxu0
    %v966 = vadd.f32 0.0, %v965
    %v967 = vpop.f32.mrf.mxu0
    %968 = vdwg.mxu0
    %969 = vmatpush.bf16.msra.mxu0 0
    %970 = vmatpush.bf16.msra.mxu0 0
    %971 = vmatpush.bf16.msra.mxu0 0
    %972 = vmatpush.bf16.msra.mxu0 0
    %973 = vmatpush.bf16.msra.mxu0 0
    %974 = vmatpush.bf16.msra.mxu0 0
    %975 = vmatpush.bf16.msra.mxu0 0
    %976 = vmatpush.bf16.msra.mxu0 %v942
    %977 = vmatmul.bf16.gmra.mxu0 %v936
    %v978 = vpop.f32.mrf.mxu0
    %v979 = vadd.f32 0.0, %v978
    %v980 = vpop.f32.mrf.mxu0
    %981 = vdwg.mxu0
    %982 = vmatpush.bf16.msra.mxu0 0
    %983 = vmatpush.bf16.msra.mxu0 0
    %984 = vmatpush.bf16.msra.mxu0 0
    %985 = vmatpush.bf16.msra.mxu0 0
    %986 = vmatpush.bf16.msra.mxu0 0
    %987 = vmatpush.bf16.msra.mxu0 0
    %988 = vmatpush.bf16.msra.mxu0 0
    %989 = vmatpush.bf16.msra.mxu0 %v945
    %990 = vmatmul.bf16.gmra.mxu0 %v936
    %v991 = vpop.f32.mrf.mxu0
    %v992 = vadd.f32 0.0, %v991
    %v993 = vpop.f32.mrf.mxu0
    %994 = vdwg.mxu0
    %995 = vmatpush.bf16.msra.mxu0 0
    %996 = vmatpush.bf16.msra.mxu0 0
    %997 = vmatpush.bf16.msra.mxu0 0
    %998 = vmatpush.bf16.msra.mxu0 0
    %999 = vmatpush.bf16.msra.mxu0 0
    %1000 = vmatpush.bf16.msra.mxu0 0
    %1001 = vmatpush.bf16.msra.mxu0 0
    %1002 = vmatpush.bf16.msra.mxu0 %v948
    %1003 = vmatmul.bf16.gmra.mxu0 %v936
    %v1004 = vpop.f32.mrf.mxu0
    %v1005 = vadd.f32 0.0, %v1004
    %v1006 = vpop.f32.mrf.mxu0
    %1007 = vdwg.mxu0
    %1008 = vmatpush.bf16.msra.mxu0 0
    %1009 = vmatpush.bf16.msra.mxu0 0
    %1010 = vmatpush.bf16.msra.mxu0 0
    %1011 = vmatpush.bf16.msra.mxu0 0
    %1012 = vmatpush.bf16.msra.mxu0 0
    %1013 = vmatpush.bf16.msra.mxu0 0
    %1014 = vmatpush.bf16.msra.mxu0 0
    %1015 = vmatpush.bf16.msra.mxu0 %v951
    %1016 = vmatmul.bf16.gmra.mxu0 %v936
    %v1017 = vpop.f32.mrf.mxu0
    %v1018 = vadd.f32 0.0, %v1017
    %v1019 = vpop.f32.mrf.mxu0
    %1020 = vdwg.mxu0
    %1021 = vmatpush.bf16.msra.mxu0 0
    %1022 = vmatpush.bf16.msra.mxu0 0
    %1023 = vmatpush.bf16.msra.mxu0 0
    %1024 = vmatpush.bf16.msra.mxu0 0
    %1025 = vmatpush.bf16.msra.mxu0 0
    %1026 = vmatpush.bf16.msra.mxu0 0
    %1027 = vmatpush.bf16.msra.mxu0 0
    %1028 = vmatpush.bf16.msra.mxu0 %v954
    %1029 = vmatmul.bf16.gmra.mxu0 %v936
    %v1030 = vpop.f32.mrf.mxu0
    %v1031 = vadd.f32 0.0, %v1030
    %v1032 = vpop.f32.mrf.mxu0
    %1033 = vdwg.mxu0
    %v1034 = vld [vmem:[#allocation2] sm:$0xff]
    %v1035 = vld [vmem:[#allocation2 + $0x8] sm:$0xff]
    %v1036 = vld [vmem:[#allocation2 + $0x10] sm:$0xff]
    %v1037 = vld [vmem:[#allocation2 + $0x18] sm:$0xff]
    %v1038 = vld [vmem:[#allocation2 + $0x20] sm:$0xff]
    %v1039 = vld [vmem:[#allocation2 + $0x28] sm:$0xff]
    %v1088 = vrot.slane %v282, 7
    %vm1089 = vcmask 1041409
    %v1090 = vsel %vm1089, %v1088, %v168
    %v1091 = vrot.slane %v396, 6
    %vm1092 = vcmask 1042434
    %v1093 = vsel %vm1092, %v1091, %v1090
    %v1094 = vrot.slane %v510, 5
    %vm1095 = vcmask 1043459
    %v1096 = vsel %vm1095, %v1094, %v1093
    %v1097 = vrot.slane %v624, 4
    %vm1098 = vcmask 1044484
    %v1099 = vsel %vm1098, %v1097, %v1096
    %v1100 = vrot.slane %v738, 3
    %vm1101 = vcmask 1045509
    %v1102 = vsel %vm1101, %v1100, %v1099
    %v1103 = vrot.slane %v852, 2
    %vm1104 = vcmask 1046534
    %v1105 = vsel %vm1104, %v1103, %v1102
    %v1106 = vrot.slane %v966, 1
    %vm1107 = vcmask 1047559
    %v1108 = vsel %vm1107, %v1106, %v1105
    %v1109 = vrot.slane %v295, 7
    %v1110 = vsel %vm1089, %v1109, %v181
    %v1111 = vrot.slane %v409, 6
    %v1112 = vsel %vm1092, %v1111, %v1110
    %v1113 = vrot.slane %v523, 5
    %v1114 = vsel %vm1095, %v1113, %v1112
    %v1115 = vrot.slane %v637, 4
    %v1116 = vsel %vm1098, %v1115, %v1114
    %v1117 = vrot.slane %v751, 3
    %v1118 = vsel %vm1101, %v1117, %v1116
    %v1119 = vrot.slane %v865, 2
    %v1120 = vsel %vm1104, %v1119, %v1118
    %v1121 = vrot.slane %v979, 1
    %v1122 = vsel %vm1107, %v1121, %v1120
    %v1123 = vrot.slane %v308, 7
    %v1124 = vsel %vm1089, %v1123, %v194
    %v1125 = vrot.slane %v422, 6
    %v1126 = vsel %vm1092, %v1125, %v1124
    %v1127 = vrot.slane %v536, 5
    %v1128 = vsel %vm1095, %v1127, %v1126
    %v1129 = vrot.slane %v650, 4
    %v1130 = vsel %vm1098, %v1129, %v1128
    %v1131 = vrot.slane %v764, 3
    %v1132 = vsel %vm1101, %v1131, %v1130
    %v1133 = vrot.slane %v878, 2
    %v1134 = vsel %vm1104, %v1133, %v1132
    %v1135 = vrot.slane %v992, 1
    %v1136 = vsel %vm1107, %v1135, %v1134
    %v1137 = vrot.slane %v321, 7
    %v1138 = vsel %vm1089, %v1137, %v207
    %v1139 = vrot.slane %v435, 6
    %v1140 = vsel %vm1092, %v1139, %v1138
    %v1141 = vrot.slane %v549, 5
    %v1142 = vsel %vm1095, %v1141, %v1140
    %v1143 = vrot.slane %v663, 4
    %v1144 = vsel %vm1098, %v1143, %v1142
    %v1145 = vrot.slane %v777, 3
    %v1146 = vsel %vm1101, %v1145, %v1144
    %v1147 = vrot.slane %v891, 2
    %v1148 = vsel %vm1104, %v1147, %v1146
    %v1149 = vrot.slane %v1005, 1
    %v1150 = vsel %vm1107, %v1149, %v1148
    %v1151 = vrot.slane %v334, 7
    %v1152 = vsel %vm1089, %v1151, %v220
    %v1153 = vrot.slane %v448, 6
    %v1154 = vsel %vm1092, %v1153, %v1152
    %v1155 = vrot.slane %v562, 5
    %v1156 = vsel %vm1095, %v1155, %v1154
    %v1157 = vrot.slane %v676, 4
    %v1158 = vsel %vm1098, %v1157, %v1156
    %v1159 = vrot.slane %v790, 3
    %v1160 = vsel %vm1101, %v1159, %v1158
    %v1161 = vrot.slane %v904, 2
    %v1162 = vsel %vm1104, %v1161, %v1160
    %v1163 = vrot.slane %v1018, 1
    %v1164 = vsel %vm1107, %v1163, %v1162
    %v1165 = vrot.slane %v347, 7
    %v1166 = vsel %vm1089, %v1165, %v233
    %v1167 = vrot.slane %v461, 6
    %v1168 = vsel %vm1092, %v1167, %v1166
    %v1169 = vrot.slane %v575, 5
    %v1170 = vsel %vm1095, %v1169, %v1168
    %v1171 = vrot.slane %v689, 4
    %v1172 = vsel %vm1098, %v1171, %v1170
    %v1173 = vrot.slane %v803, 3
    %v1174 = vsel %vm1101, %v1173, %v1172
    %v1175 = vrot.slane %v917, 2
    %v1176 = vsel %vm1104, %v1175, %v1174
    %v1177 = vrot.slane %v1031, 1
    %v1178 = vsel %vm1107, %v1177, %v1176
    %v1185 = vadd.f32 %v1034, %v1108
    %v1186 = vadd.f32 %v1035, %v1122
    %v1187 = vadd.f32 %v1036, %v1136
    %v1188 = vadd.f32 %v1037, %v1150
    %v1189 = vadd.f32 %v1038, %v1164
    %v1190 = vadd.f32 %v1039, %v1178
    %1191 = vst [vmem:[#allocation2] sm:$0xff] %v1185
    %1192 = vst [vmem:[#allocation2 + $0x8] sm:$0xff] %v1186
    %1193 = vst [vmem:[#allocation2 + $0x10] sm:$0xff] %v1187
    %1194 = vst [vmem:[#allocation2 + $0x18] sm:$0xff] %v1188
    %1195 = vst [vmem:[#allocation2 + $0x20] sm:$0xff] %v1189
    %1196 = vst [vmem:[#allocation2 + $0x28] sm:$0xff] %v1190
    // Predicated region
    $region46: #{tpu_custom_call.1} parent=1 // pred_check
      %p1197 = pneg %p78
    $region47: #{tpu_custom_call.1} parent=1 // pred_check_branch
      %1199 = sbr.rel (%p1197) target = $region49
    $region48: #{tpu_custom_call.1} parent=1 // pred_region
      %v1200 = vld [vmem:[#allocation2] sm:$0xff]
      %v1201 = vld [vmem:[#allocation2 + $0x8] sm:$0xff]
      %v1202 = vld [vmem:[#allocation2 + $0x10] sm:$0xff]
      %v1203 = vld [vmem:[#allocation2 + $0x18] sm:$0xff]
      %v1204 = vld [vmem:[#allocation2 + $0x20] sm:$0xff]
      %v1205 = vld [vmem:[#allocation2 + $0x28] sm:$0xff]
      %v1206 = vld [vmem:[%s2] sm:$0xff]
      %v1207 = vrcp.pop %v1206
      %1209 = vset.pattern.permute.xlu0 0
      %1210 = vperm.xlu0 %1209, %v1207
      %v1211 = vpop.permute.xlu0 %1210
      %v1213 = vmul.f32 %v1200, %v1211
      %v1214 = vmul.f32 %v1201, %v1211
      %v1215 = vmul.f32 %v1202, %v1211
      %v1216 = vmul.f32 %v1203, %v1211
      %v1217 = vmul.f32 %v1204, %v1211
      %v1218 = vmul.f32 %v1205, %v1211
      %v1219 = vpack.c.bf16 %v1213, %v1213
      %v1220 = vpack.c.bf16 %v1214, %v1214
      %v1221 = vpack.c.bf16 %v1215, %v1215
      %v1222 = vpack.c.bf16 %v1216, %v1216
      %v1223 = vpack.c.bf16 %v1217, %v1217
      %v1224 = vpack.c.bf16 %v1218, %v1218
      %v1225 = vld [vmem:[#allocation6] sm:$0xff]
      %v1226 = vld [vmem:[#allocation6 + $0x8] sm:$0xf]
      %v1227 = vld [vmem:[#allocation6 + $0xc] sm:$0xff]
      %v1228 = vld [vmem:[#allocation6 + $0x14] sm:$0xf]
      %v1229 = vld [vmem:[#allocation6 + $0x18] sm:$0xff]
      %v1230 = vld [vmem:[#allocation6 + $0x20] sm:$0xf]
      %v1231 = vld [vmem:[#allocation6 + $0x24] sm:$0xff]
      %v1232 = vld [vmem:[#allocation6 + $0x2c] sm:$0xf]
      %v1233 = vld [vmem:[#allocation6 + $0x30] sm:$0xff]
      %v1234 = vld [vmem:[#allocation6 + $0x38] sm:$0xf]
      %v1235 = vld [vmem:[#allocation6 + $0x3c] sm:$0xff]
      %v1236 = vld [vmem:[#allocation6 + $0x44] sm:$0xf]
      %v1237 = vld [vmem:[#allocation6 + $0x48] sm:$0xff]
      %v1238 = vld [vmem:[#allocation6 + $0x50] sm:$0xf]
      %v1239 = vld [vmem:[#allocation6 + $0x54] sm:$0xff]
      %v1240 = vld [vmem:[#allocation6 + $0x5c] sm:$0xf]
      %v1241 = vld [vmem:[#allocation6 + $0x60] sm:$0xff]
      %v1242 = vld [vmem:[#allocation6 + $0x68] sm:$0xf]
      %v1243 = vld [vmem:[#allocation6 + $0x6c] sm:$0xff]
      %v1244 = vld [vmem:[#allocation6 + $0x74] sm:$0xf]
      %v1245 = vld [vmem:[#allocation6 + $0x78] sm:$0xff]
      %v1246 = vld [vmem:[#allocation6 + $0x80] sm:$0xf]
      %v1247 = vld [vmem:[#allocation6 + $0x84] sm:$0xff]
      %v1248 = vld [vmem:[#allocation6 + $0x8c] sm:$0xf]
      %v1249 = vld [vmem:[#allocation6 + $0x90] sm:$0xff]
      %v1250 = vld [vmem:[#allocation6 + $0x98] sm:$0xf]
      %v1251 = vld [vmem:[#allocation6 + $0x9c] sm:$0xff]
      %v1252 = vld [vmem:[#allocation6 + $0xa4] sm:$0xf]
      %v1253 = vld [vmem:[#allocation6 + $0xa8] sm:$0xff]
      %v1254 = vld [vmem:[#allocation6 + $0xb0] sm:$0xf]
      %v1255 = vld [vmem:[#allocation6 + $0xb4] sm:$0xff]
      %v1256 = vld [vmem:[#allocation6 + $0xbc] sm:$0xf]
      %v1257 = vld [vmem:[#allocation6 + $0xc0] sm:$0xff]
      %v1258 = vld [vmem:[#allocation6 + $0xc8] sm:$0xf]
      %v1259 = vld [vmem:[#allocation6 + $0xcc] sm:$0xff]
      %v1260 = vld [vmem:[#allocation6 + $0xd4] sm:$0xf]
      %v1261 = vld [vmem:[#allocation6 + $0xd8] sm:$0xff]
      %v1262 = vld [vmem:[#allocation6 + $0xe0] sm:$0xf]
      %v1263 = vld [vmem:[#allocation6 + $0xe4] sm:$0xff]
      %v1264 = vld [vmem:[#allocation6 + $0xec] sm:$0xf]
      %v1265 = vld [vmem:[#allocation6 + $0xf0] sm:$0xff]
      %v1266 = vld [vmem:[#allocation6 + $0xf8] sm:$0xf]
      %v1267 = vld [vmem:[#allocation6 + $0xfc] sm:$0xff]
      %v1268 = vld [vmem:[#allocation6 + $0x104] sm:$0xf]
      %v1269 = vld [vmem:[#allocation6 + $0x108] sm:$0xff]
      %v1270 = vld [vmem:[#allocation6 + $0x110] sm:$0xf]
      %v1271 = vld [vmem:[#allocation6 + $0x114] sm:$0xff]
      %v1272 = vld [vmem:[#allocation6 + $0x11c] sm:$0xf]
      %v1273 = vld [vmem:[#allocation6 + $0x120] sm:$0xff]
      %v1274 = vld [vmem:[#allocation6 + $0x128] sm:$0xf]
      %v1275 = vld [vmem:[#allocation6 + $0x12c] sm:$0xff]
      %v1276 = vld [vmem:[#allocation6 + $0x134] sm:$0xf]
      %v1277 = vld [vmem:[#allocation6 + $0x138] sm:$0xff]
      %v1278 = vld [vmem:[#allocation6 + $0x140] sm:$0xf]
      %v1279 = vld [vmem:[#allocation6 + $0x144] sm:$0xff]
      %v1280 = vld [vmem:[#allocation6 + $0x14c] sm:$0xf]
      %v1281 = vld [vmem:[#allocation6 + $0x150] sm:$0xff]
      %v1282 = vld [vmem:[#allocation6 + $0x158] sm:$0xf]
      %v1283 = vld [vmem:[#allocation6 + $0x15c] sm:$0xff]
      %v1284 = vld [vmem:[#allocation6 + $0x164] sm:$0xf]
      %v1285 = vld [vmem:[#allocation6 + $0x168] sm:$0xff]
      %v1286 = vld [vmem:[#allocation6 + $0x170] sm:$0xf]
      %v1287 = vld [vmem:[#allocation6 + $0x174] sm:$0xff]
      %v1288 = vld [vmem:[#allocation6 + $0x17c] sm:$0xf]
      %v1289 = vld [vmem:[#allocation6 + $0x180] sm:$0xff]
      %v1290 = vld [vmem:[#allocation6 + $0x188] sm:$0xf]
      %v1291 = vld [vmem:[#allocation6 + $0x18c] sm:$0xff]
      %v1292 = vld [vmem:[#allocation6 + $0x194] sm:$0xf]
      %v1293 = vld [vmem:[#allocation6 + $0x198] sm:$0xff]
      %v1294 = vld [vmem:[#allocation6 + $0x1a0] sm:$0xf]
      %v1295 = vld [vmem:[#allocation6 + $0x1a4] sm:$0xff]
      %v1296 = vld [vmem:[#allocation6 + $0x1ac] sm:$0xf]
      %v1297 = vld [vmem:[#allocation6 + $0x1b0] sm:$0xff]
      %v1298 = vld [vmem:[#allocation6 + $0x1b8] sm:$0xf]
      %v1299 = vld [vmem:[#allocation6 + $0x1bc] sm:$0xff]
      %v1300 = vld [vmem:[#allocation6 + $0x1c4] sm:$0xf]
      %v1301 = vld [vmem:[#allocation6 + $0x1c8] sm:$0xff]
      %v1302 = vld [vmem:[#allocation6 + $0x1d0] sm:$0xf]
      %v1303 = vld [vmem:[#allocation6 + $0x1d4] sm:$0xff]
      %v1304 = vld [vmem:[#allocation6 + $0x1dc] sm:$0xf]
      %v1305 = vld [vmem:[#allocation6 + $0x1e0] sm:$0xff]
      %v1306 = vld [vmem:[#allocation6 + $0x1e8] sm:$0xf]
      %v1307 = vld [vmem:[#allocation6 + $0x1ec] sm:$0xff]
      %v1308 = vld [vmem:[#allocation6 + $0x1f4] sm:$0xf]
      %v1309 = vld [vmem:[#allocation6 + $0x1f8] sm:$0xff]
      %v1310 = vld [vmem:[#allocation6 + $0x200] sm:$0xf]
      %v1311 = vld [vmem:[#allocation6 + $0x204] sm:$0xff]
      %v1312 = vld [vmem:[#allocation6 + $0x20c] sm:$0xf]
      %v1313 = vld [vmem:[#allocation6 + $0x210] sm:$0xff]
      %v1314 = vld [vmem:[#allocation6 + $0x218] sm:$0xf]
      %v1315 = vld [vmem:[#allocation6 + $0x21c] sm:$0xff]
      %v1316 = vld [vmem:[#allocation6 + $0x224] sm:$0xf]
      %v1317 = vld [vmem:[#allocation6 + $0x228] sm:$0xff]
      %v1318 = vld [vmem:[#allocation6 + $0x230] sm:$0xf]
      %v1319 = vld [vmem:[#allocation6 + $0x234] sm:$0xff]
      %v1320 = vld [vmem:[#allocation6 + $0x23c] sm:$0xf]
      %v1321 = vld [vmem:[#allocation6 + $0x240] sm:$0xff]
      %v1322 = vld [vmem:[#allocation6 + $0x248] sm:$0xf]
      %v1323 = vld [vmem:[#allocation6 + $0x24c] sm:$0xff]
      %v1324 = vld [vmem:[#allocation6 + $0x254] sm:$0xf]
      %v1325 = vld [vmem:[#allocation6 + $0x258] sm:$0xff]
      %v1326 = vld [vmem:[#allocation6 + $0x260] sm:$0xf]
      %v1327 = vld [vmem:[#allocation6 + $0x264] sm:$0xff]
      %v1328 = vld [vmem:[#allocation6 + $0x26c] sm:$0xf]
      %v1329 = vld [vmem:[#allocation6 + $0x270] sm:$0xff]
      %v1330 = vld [vmem:[#allocation6 + $0x278] sm:$0xf]
      %v1331 = vld [vmem:[#allocation6 + $0x27c] sm:$0xff]
      %v1332 = vld [vmem:[#allocation6 + $0x284] sm:$0xf]
      %v1333 = vld [vmem:[#allocation6 + $0x288] sm:$0xff]
      %v1334 = vld [vmem:[#allocation6 + $0x290] sm:$0xf]
      %v1335 = vld [vmem:[#allocation6 + $0x294] sm:$0xff]
      %v1336 = vld [vmem:[#allocation6 + $0x29c] sm:$0xf]
      %v1337 = vld [vmem:[#allocation6 + $0x2a0] sm:$0xff]
      %v1338 = vld [vmem:[#allocation6 + $0x2a8] sm:$0xf]
      %v1339 = vld [vmem:[#allocation6 + $0x2ac] sm:$0xff]
      %v1340 = vld [vmem:[#allocation6 + $0x2b4] sm:$0xf]
      %v1341 = vld [vmem:[#allocation6 + $0x2b8] sm:$0xff]
      %v1342 = vld [vmem:[#allocation6 + $0x2c0] sm:$0xf]
      %v1343 = vld [vmem:[#allocation6 + $0x2c4] sm:$0xff]
      %v1344 = vld [vmem:[#allocation6 + $0x2cc] sm:$0xf]
      %v1345 = vld [vmem:[#allocation6 + $0x2d0] sm:$0xff]
      %v1346 = vld [vmem:[#allocation6 + $0x2d8] sm:$0xf]
      %v1347 = vld [vmem:[#allocation6 + $0x2dc] sm:$0xff]
      %v1348 = vld [vmem:[#allocation6 + $0x2e4] sm:$0xf]
      %v1349 = vld [vmem:[#allocation6 + $0x2e8] sm:$0xff]
      %v1350 = vld [vmem:[#allocation6 + $0x2f0] sm:$0xf]
      %v1351 = vld [vmem:[#allocation6 + $0x2f4] sm:$0xff]
      %v1352 = vld [vmem:[#allocation6 + $0x2fc] sm:$0xf]
      %v1353 = vld [vmem:[#allocation6 + $0x300] sm:$0xff]
      %v1354 = vld [vmem:[#allocation6 + $0x308] sm:$0xf]
      %v1355 = vld [vmem:[#allocation6 + $0x30c] sm:$0xff]
      %v1356 = vld [vmem:[#allocation6 + $0x314] sm:$0xf]
      %v1357 = vld [vmem:[#allocation6 + $0x318] sm:$0xff]
      %v1358 = vld [vmem:[#allocation6 + $0x320] sm:$0xf]
      %v1359 = vld [vmem:[#allocation6 + $0x324] sm:$0xff]
      %v1360 = vld [vmem:[#allocation6 + $0x32c] sm:$0xf]
      %v1361 = vld [vmem:[#allocation6 + $0x330] sm:$0xff]
      %v1362 = vld [vmem:[#allocation6 + $0x338] sm:$0xf]
      %v1363 = vld [vmem:[#allocation6 + $0x33c] sm:$0xff]
      %v1364 = vld [vmem:[#allocation6 + $0x344] sm:$0xf]
      %v1365 = vld [vmem:[#allocation6 + $0x348] sm:$0xff]
      %v1366 = vld [vmem:[#allocation6 + $0x350] sm:$0xf]
      %v1367 = vld [vmem:[#allocation6 + $0x354] sm:$0xff]
      %v1368 = vld [vmem:[#allocation6 + $0x35c] sm:$0xf]
      %v1369 = vld [vmem:[#allocation6 + $0x360] sm:$0xff]
      %v1370 = vld [vmem:[#allocation6 + $0x368] sm:$0xf]
      %v1371 = vld [vmem:[#allocation6 + $0x36c] sm:$0xff]
      %v1372 = vld [vmem:[#allocation6 + $0x374] sm:$0xf]
      %v1373 = vld [vmem:[#allocation6 + $0x378] sm:$0xff]
      %v1374 = vld [vmem:[#allocation6 + $0x380] sm:$0xf]
      %v1375 = vld [vmem:[#allocation6 + $0x384] sm:$0xff]
      %v1376 = vld [vmem:[#allocation6 + $0x38c] sm:$0xf]
      %v1377 = vld [vmem:[#allocation6 + $0x390] sm:$0xff]
      %v1378 = vld [vmem:[#allocation6 + $0x398] sm:$0xf]
      %v1379 = vld [vmem:[#allocation6 + $0x39c] sm:$0xff]
      %v1380 = vld [vmem:[#allocation6 + $0x3a4] sm:$0xf]
      %v1381 = vld [vmem:[#allocation6 + $0x3a8] sm:$0xff]
      %v1382 = vld [vmem:[#allocation6 + $0x3b0] sm:$0xf]
      %v1383 = vld [vmem:[#allocation6 + $0x3b4] sm:$0xff]
      %v1384 = vld [vmem:[#allocation6 + $0x3bc] sm:$0xf]
      %v1385 = vld [vmem:[#allocation6 + $0x3c0] sm:$0xff]
      %v1386 = vld [vmem:[#allocation6 + $0x3c8] sm:$0xf]
      %v1387 = vld [vmem:[#allocation6 + $0x3cc] sm:$0xff]
      %v1388 = vld [vmem:[#allocation6 + $0x3d4] sm:$0xf]
      %v1389 = vld [vmem:[#allocation6 + $0x3d8] sm:$0xff]
      %v1390 = vld [vmem:[#allocation6 + $0x3e0] sm:$0xf]
      %v1391 = vld [vmem:[#allocation6 + $0x3e4] sm:$0xff]
      %v1392 = vld [vmem:[#allocation6 + $0x3ec] sm:$0xf]
      %v1393 = vld [vmem:[#allocation6 + $0x3f0] sm:$0xff]
      %v1394 = vld [vmem:[#allocation6 + $0x3f8] sm:$0xf]
      %v1395 = vld [vmem:[#allocation6 + $0x3fc] sm:$0xff]
      %v1396 = vld [vmem:[#allocation6 + $0x404] sm:$0xf]
      %v1397 = vld [vmem:[#allocation6 + $0x408] sm:$0xff]
      %v1398 = vld [vmem:[#allocation6 + $0x410] sm:$0xf]
      %v1399 = vld [vmem:[#allocation6 + $0x414] sm:$0xff]
      %v1400 = vld [vmem:[#allocation6 + $0x41c] sm:$0xf]
      %v1401 = vld [vmem:[#allocation6 + $0x420] sm:$0xff]
      %v1402 = vld [vmem:[#allocation6 + $0x428] sm:$0xf]
      %v1403 = vld [vmem:[#allocation6 + $0x42c] sm:$0xff]
      %v1404 = vld [vmem:[#allocation6 + $0x434] sm:$0xf]
      %v1405 = vld [vmem:[#allocation6 + $0x438] sm:$0xff]
      %v1406 = vld [vmem:[#allocation6 + $0x440] sm:$0xf]
      %v1407 = vld [vmem:[#allocation6 + $0x444] sm:$0xff]
      %v1408 = vld [vmem:[#allocation6 + $0x44c] sm:$0xf]
      %v1409 = vld [vmem:[#allocation6 + $0x450] sm:$0xff]
      %v1410 = vld [vmem:[#allocation6 + $0x458] sm:$0xf]
      %v1411 = vld [vmem:[#allocation6 + $0x45c] sm:$0xff]
      %v1412 = vld [vmem:[#allocation6 + $0x464] sm:$0xf]
      %v1413 = vld [vmem:[#allocation6 + $0x468] sm:$0xff]
      %v1414 = vld [vmem:[#allocation6 + $0x470] sm:$0xf]
      %v1415 = vld [vmem:[#allocation6 + $0x474] sm:$0xff]
      %v1416 = vld [vmem:[#allocation6 + $0x47c] sm:$0xf]
      %v1417 = vld [vmem:[%s4] sm:$0x7]
      %v1419 = vperm.slane %v1417, 0
      %v1420 = vperm.slane %v1417, 1
      %v1421 = vperm.slane %v1417, 2
      %v1617 = vunpack.c.l.b16 %v1225
      %v1618 = vunpack.c.h.b16 %v1225
      %v1619 = vunpack.c.l.b16 %v1226
      %v1620 = vunpack.c.l.b16 %v1227
      %v1621 = vunpack.c.h.b16 %v1227
      %v1622 = vunpack.c.l.b16 %v1228
      %v1623 = vunpack.c.l.b16 %v1229
      %v1624 = vunpack.c.h.b16 %v1229
      %v1625 = vunpack.c.l.b16 %v1230
      %v1626 = vunpack.c.l.b16 %v1231
      %v1627 = vunpack.c.h.b16 %v1231
      %v1628 = vunpack.c.l.b16 %v1232
      %v1629 = vunpack.c.l.b16 %v1233
      %v1630 = vunpack.c.h.b16 %v1233
      %v1631 = vunpack.c.l.b16 %v1234
      %v1632 = vunpack.c.l.b16 %v1235
      %v1633 = vunpack.c.h.b16 %v1235
      %v1634 = vunpack.c.l.b16 %v1236
      %v1635 = vunpack.c.l.b16 %v1237
      %v1636 = vunpack.c.h.b16 %v1237
      %v1637 = vunpack.c.l.b16 %v1238
      %v1638 = vunpack.c.l.b16 %v1239
      %v1639 = vunpack.c.h.b16 %v1239
      %v1640 = vunpack.c.l.b16 %v1240
      %v1641 = vunpack.c.l.b16 %v1241
      %v1642 = vunpack.c.h.b16 %v1241
      %v1643 = vunpack.c.l.b16 %v1242
      %v1644 = vunpack.c.l.b16 %v1243
      %v1645 = vunpack.c.h.b16 %v1243
      %v1646 = vunpack.c.l.b16 %v1244
      %v1647 = vunpack.c.l.b16 %v1245
      %v1648 = vunpack.c.h.b16 %v1245
      %v1649 = vunpack.c.l.b16 %v1246
      %v1650 = vunpack.c.l.b16 %v1247
      %v1651 = vunpack.c.h.b16 %v1247
      %v1652 = vunpack.c.l.b16 %v1248
      %v1653 = vunpack.c.l.b16 %v1249
      %v1654 = vunpack.c.h.b16 %v1249
      %v1655 = vunpack.c.l.b16 %v1250
      %v1656 = vunpack.c.l.b16 %v1251
      %v1657 = vunpack.c.h.b16 %v1251
      %v1658 = vunpack.c.l.b16 %v1252
      %v1659 = vunpack.c.l.b16 %v1253
      %v1660 = vunpack.c.h.b16 %v1253
      %v1661 = vunpack.c.l.b16 %v1254
      %v1662 = vunpack.c.l.b16 %v1255
      %v1663 = vunpack.c.h.b16 %v1255
      %v1664 = vunpack.c.l.b16 %v1256
      %v1665 = vunpack.c.l.b16 %v1257
      %v1666 = vunpack.c.h.b16 %v1257
      %v1667 = vunpack.c.l.b16 %v1258
      %v1668 = vunpack.c.l.b16 %v1259
      %v1669 = vunpack.c.h.b16 %v1259
      %v1670 = vunpack.c.l.b16 %v1260
      %v1671 = vunpack.c.l.b16 %v1261
      %v1672 = vunpack.c.h.b16 %v1261
      %v1673 = vunpack.c.l.b16 %v1262
      %v1674 = vunpack.c.l.b16 %v1263
      %v1675 = vunpack.c.h.b16 %v1263
      %v1676 = vunpack.c.l.b16 %v1264
      %v1677 = vunpack.c.l.b16 %v1265
      %v1678 = vunpack.c.h.b16 %v1265
      %v1679 = vunpack.c.l.b16 %v1266
      %v1680 = vunpack.c.l.b16 %v1267
      %v1681 = vunpack.c.h.b16 %v1267
      %v1682 = vunpack.c.l.b16 %v1268
      %v1683 = vunpack.c.l.b16 %v1269
      %v1684 = vunpack.c.h.b16 %v1269
      %v1685 = vunpack.c.l.b16 %v1270
      %v1686 = vunpack.c.l.b16 %v1271
      %v1687 = vunpack.c.h.b16 %v1271
      %v1688 = vunpack.c.l.b16 %v1272
      %v1689 = vunpack.c.l.b16 %v1273
      %v1690 = vunpack.c.h.b16 %v1273
      %v1691 = vunpack.c.l.b16 %v1274
      %v1692 = vunpack.c.l.b16 %v1275
      %v1693 = vunpack.c.h.b16 %v1275
      %v1694 = vunpack.c.l.b16 %v1276
      %v1695 = vunpack.c.l.b16 %v1277
      %v1696 = vunpack.c.h.b16 %v1277
      %v1697 = vunpack.c.l.b16 %v1278
      %v1698 = vunpack.c.l.b16 %v1279
      %v1699 = vunpack.c.h.b16 %v1279
      %v1700 = vunpack.c.l.b16 %v1280
      %v1701 = vunpack.c.l.b16 %v1281
      %v1702 = vunpack.c.h.b16 %v1281
      %v1703 = vunpack.c.l.b16 %v1282
      %v1704 = vunpack.c.l.b16 %v1283
      %v1705 = vunpack.c.h.b16 %v1283
      %v1706 = vunpack.c.l.b16 %v1284
      %v1707 = vunpack.c.l.b16 %v1285
      %v1708 = vunpack.c.h.b16 %v1285
      %v1709 = vunpack.c.l.b16 %v1286
      %v1710 = vunpack.c.l.b16 %v1287
      %v1711 = vunpack.c.h.b16 %v1287
      %v1712 = vunpack.c.l.b16 %v1288
      %v1713 = vunpack.c.l.b16 %v1289
      %v1714 = vunpack.c.h.b16 %v1289
      %v1715 = vunpack.c.l.b16 %v1290
      %v1716 = vunpack.c.l.b16 %v1291
      %v1717 = vunpack.c.h.b16 %v1291
      %v1718 = vunpack.c.l.b16 %v1292
      %v1719 = vunpack.c.l.b16 %v1293
      %v1720 = vunpack.c.h.b16 %v1293
      %v1721 = vunpack.c.l.b16 %v1294
      %v1722 = vunpack.c.l.b16 %v1295
      %v1723 = vunpack.c.h.b16 %v1295
      %v1724 = vunpack.c.l.b16 %v1296
      %v1725 = vunpack.c.l.b16 %v1297
      %v1726 = vunpack.c.h.b16 %v1297
      %v1727 = vunpack.c.l.b16 %v1298
      %v1728 = vunpack.c.l.b16 %v1299
      %v1729 = vunpack.c.h.b16 %v1299
      %v1730 = vunpack.c.l.b16 %v1300
      %v1731 = vunpack.c.l.b16 %v1301
      %v1732 = vunpack.c.h.b16 %v1301
      %v1733 = vunpack.c.l.b16 %v1302
      %v1734 = vunpack.c.l.b16 %v1303
      %v1735 = vunpack.c.h.b16 %v1303
      %v1736 = vunpack.c.l.b16 %v1304
      %v1737 = vunpack.c.l.b16 %v1305
      %v1738 = vunpack.c.h.b16 %v1305
      %v1739 = vunpack.c.l.b16 %v1306
      %v1740 = vunpack.c.l.b16 %v1307
      %v1741 = vunpack.c.h.b16 %v1307
      %v1742 = vunpack.c.l.b16 %v1308
      %v1743 = vunpack.c.l.b16 %v1309
      %v1744 = vunpack.c.h.b16 %v1309
      %v1745 = vunpack.c.l.b16 %v1310
      %v1746 = vunpack.c.l.b16 %v1311
      %v1747 = vunpack.c.h.b16 %v1311
      %v1748 = vunpack.c.l.b16 %v1312
      %v1749 = vunpack.c.l.b16 %v1313
      %v1750 = vunpack.c.h.b16 %v1313
      %v1751 = vunpack.c.l.b16 %v1314
      %v1752 = vunpack.c.l.b16 %v1315
      %v1753 = vunpack.c.h.b16 %v1315
      %v1754 = vunpack.c.l.b16 %v1316
      %v1755 = vunpack.c.l.b16 %v1317
      %v1756 = vunpack.c.h.b16 %v1317
      %v1757 = vunpack.c.l.b16 %v1318
      %v1758 = vunpack.c.l.b16 %v1319
      %v1759 = vunpack.c.h.b16 %v1319
      %v1760 = vunpack.c.l.b16 %v1320
      %v1761 = vunpack.c.l.b16 %v1321
      %v1762 = vunpack.c.h.b16 %v1321
      %v1763 = vunpack.c.l.b16 %v1322
      %v1764 = vunpack.c.l.b16 %v1323
      %v1765 = vunpack.c.h.b16 %v1323
      %v1766 = vunpack.c.l.b16 %v1324
      %v1767 = vunpack.c.l.b16 %v1325
      %v1768 = vunpack.c.h.b16 %v1325
      %v1769 = vunpack.c.l.b16 %v1326
      %v1770 = vunpack.c.l.b16 %v1327
      %v1771 = vunpack.c.h.b16 %v1327
      %v1772 = vunpack.c.l.b16 %v1328
      %v1773 = vunpack.c.l.b16 %v1329
      %v1774 = vunpack.c.h.b16 %v1329
      %v1775 = vunpack.c.l.b16 %v1330
      %v1776 = vunpack.c.l.b16 %v1331
      %v1777 = vunpack.c.h.b16 %v1331
      %v1778 = vunpack.c.l.b16 %v1332
      %v1779 = vunpack.c.l.b16 %v1333
      %v1780 = vunpack.c.h.b16 %v1333
      %v1781 = vunpack.c.l.b16 %v1334
      %v1782 = vunpack.c.l.b16 %v1335
      %v1783 = vunpack.c.h.b16 %v1335
      %v1784 = vunpack.c.l.b16 %v1336
      %v1785 = vunpack.c.l.b16 %v1337
      %v1786 = vunpack.c.h.b16 %v1337
      %v1787 = vunpack.c.l.b16 %v1338
      %v1788 = vunpack.c.l.b16 %v1339
      %v1789 = vunpack.c.h.b16 %v1339
      %v1790 = vunpack.c.l.b16 %v1340
      %v1791 = vunpack.c.l.b16 %v1341
      %v1792 = vunpack.c.h.b16 %v1341
      %v1793 = vunpack.c.l.b16 %v1342
      %v1794 = vunpack.c.l.b16 %v1343
      %v1795 = vunpack.c.h.b16 %v1343
      %v1796 = vunpack.c.l.b16 %v1344
      %v1797 = vunpack.c.l.b16 %v1345
      %v1798 = vunpack.c.h.b16 %v1345
      %v1799 = vunpack.c.l.b16 %v1346
      %v1800 = vunpack.c.l.b16 %v1347
      %v1801 = vunpack.c.h.b16 %v1347
      %v1802 = vunpack.c.l.b16 %v1348
      %v1803 = vunpack.c.l.b16 %v1349
      %v1804 = vunpack.c.h.b16 %v1349
      %v1805 = vunpack.c.l.b16 %v1350
      %v1806 = vunpack.c.l.b16 %v1351
      %v1807 = vunpack.c.h.b16 %v1351
      %v1808 = vunpack.c.l.b16 %v1352
      %v1809 = vunpack.c.l.b16 %v1353
      %v1810 = vunpack.c.h.b16 %v1353
      %v1811 = vunpack.c.l.b16 %v1354
      %v1812 = vunpack.c.l.b16 %v1355
      %v1813 = vunpack.c.h.b16 %v1355
      %v1814 = vunpack.c.l.b16 %v1356
      %v1815 = vunpack.c.l.b16 %v1357
      %v1816 = vunpack.c.h.b16 %v1357
      %v1817 = vunpack.c.l.b16 %v1358
      %v1818 = vunpack.c.l.b16 %v1359
      %v1819 = vunpack.c.h.b16 %v1359
      %v1820 = vunpack.c.l.b16 %v1360
      %v1821 = vunpack.c.l.b16 %v1361
      %v1822 = vunpack.c.h.b16 %v1361
      %v1823 = vunpack.c.l.b16 %v1362
      %v1824 = vunpack.c.l.b16 %v1363
      %v1825 = vunpack.c.h.b16 %v1363
      %v1826 = vunpack.c.l.b16 %v1364
      %v1827 = vunpack.c.l.b16 %v1365
      %v1828 = vunpack.c.h.b16 %v1365
      %v1829 = vunpack.c.l.b16 %v1366
      %v1830 = vunpack.c.l.b16 %v1367
      %v1831 = vunpack.c.h.b16 %v1367
      %v1832 = vunpack.c.l.b16 %v1368
      %v1833 = vunpack.c.l.b16 %v1369
      %v1834 = vunpack.c.h.b16 %v1369
      %v1835 = vunpack.c.l.b16 %v1370
      %v1836 = vunpack.c.l.b16 %v1371
      %v1837 = vunpack.c.h.b16 %v1371
      %v1838 = vunpack.c.l.b16 %v1372
      %v1839 = vunpack.c.l.b16 %v1373
      %v1840 = vunpack.c.h.b16 %v1373
      %v1841 = vunpack.c.l.b16 %v1374
      %v1842 = vunpack.c.l.b16 %v1375
      %v1843 = vunpack.c.h.b16 %v1375
      %v1844 = vunpack.c.l.b16 %v1376
      %v1845 = vunpack.c.l.b16 %v1377
      %v1846 = vunpack.c.h.b16 %v1377
      %v1847 = vunpack.c.l.b16 %v1378
      %v1848 = vunpack.c.l.b16 %v1379
      %v1849 = vunpack.c.h.b16 %v1379
      %v1850 = vunpack.c.l.b16 %v1380
      %v1851 = vunpack.c.l.b16 %v1381
      %v1852 = vunpack.c.h.b16 %v1381
      %v1853 = vunpack.c.l.b16 %v1382
      %v1854 = vunpack.c.l.b16 %v1383
      %v1855 = vunpack.c.h.b16 %v1383
      %v1856 = vunpack.c.l.b16 %v1384
      %v1857 = vunpack.c.l.b16 %v1385
      %v1858 = vunpack.c.h.b16 %v1385
      %v1859 = vunpack.c.l.b16 %v1386
      %v1860 = vunpack.c.l.b16 %v1387
      %v1861 = vunpack.c.h.b16 %v1387
      %v1862 = vunpack.c.l.b16 %v1388
      %v1863 = vunpack.c.l.b16 %v1389
      %v1864 = vunpack.c.h.b16 %v1389
      %v1865 = vunpack.c.l.b16 %v1390
      %v1866 = vunpack.c.l.b16 %v1391
      %v1867 = vunpack.c.h.b16 %v1391
      %v1868 = vunpack.c.l.b16 %v1392
      %v1869 = vunpack.c.l.b16 %v1393
      %v1870 = vunpack.c.h.b16 %v1393
      %v1871 = vunpack.c.l.b16 %v1394
      %v1872 = vunpack.c.l.b16 %v1395
      %v1873 = vunpack.c.h.b16 %v1395
      %v1874 = vunpack.c.l.b16 %v1396
      %v1875 = vunpack.c.l.b16 %v1397
      %v1876 = vunpack.c.h.b16 %v1397
      %v1877 = vunpack.c.l.b16 %v1398
      %v1878 = vunpack.c.l.b16 %v1399
      %v1879 = vunpack.c.h.b16 %v1399
      %v1880 = vunpack.c.l.b16 %v1400
      %v1881 = vunpack.c.l.b16 %v1401
      %v1882 = vunpack.c.h.b16 %v1401
      %v1883 = vunpack.c.l.b16 %v1402
      %v1884 = vunpack.c.l.b16 %v1403
      %v1885 = vunpack.c.h.b16 %v1403
      %v1886 = vunpack.c.l.b16 %v1404
      %v1887 = vunpack.c.l.b16 %v1405
      %v1888 = vunpack.c.h.b16 %v1405
      %v1889 = vunpack.c.l.b16 %v1406
      %v1890 = vunpack.c.l.b16 %v1407
      %v1891 = vunpack.c.h.b16 %v1407
      %v1892 = vunpack.c.l.b16 %v1408
      %v1893 = vunpack.c.l.b16 %v1409
      %v1894 = vunpack.c.h.b16 %v1409
      %v1895 = vunpack.c.l.b16 %v1410
      %v1896 = vunpack.c.l.b16 %v1411
      %v1897 = vunpack.c.h.b16 %v1411
      %v1898 = vunpack.c.l.b16 %v1412
      %v1899 = vunpack.c.l.b16 %v1413
      %v1900 = vunpack.c.h.b16 %v1413
      %v1901 = vunpack.c.l.b16 %v1414
      %v1902 = vunpack.c.l.b16 %v1415
      %v1903 = vunpack.c.h.b16 %v1415
      %v1904 = vunpack.c.l.b16 %v1416
      %v1905 = vpack.c.b16 %v1620, %v1617
      %v1906 = vpack.c.b16 %v1621, %v1618
      %v1907 = vpack.c.b16 %v1622, %v1619
      %v1908 = vpack.c.b16 %v1626, %v1623
      %v1909 = vpack.c.b16 %v1627, %v1624
      %v1910 = vpack.c.b16 %v1628, %v1625
      %v1911 = vpack.c.b16 %v1632, %v1629
      %v1912 = vpack.c.b16 %v1633, %v1630
      %v1913 = vpack.c.b16 %v1634, %v1631
      %v1914 = vpack.c.b16 %v1638, %v1635
      %v1915 = vpack.c.b16 %v1639, %v1636
      %v1916 = vpack.c.b16 %v1640, %v1637
      %v1917 = vpack.c.b16 %v1644, %v1641
      %v1918 = vpack.c.b16 %v1645, %v1642
      %v1919 = vpack.c.b16 %v1646, %v1643
      %v1920 = vpack.c.b16 %v1650, %v1647
      %v1921 = vpack.c.b16 %v1651, %v1648
      %v1922 = vpack.c.b16 %v1652, %v1649
      %v1923 = vpack.c.b16 %v1656, %v1653
      %v1924 = vpack.c.b16 %v1657, %v1654
      %v1925 = vpack.c.b16 %v1658, %v1655
      %v1926 = vpack.c.b16 %v1662, %v1659
      %v1927 = vpack.c.b16 %v1663, %v1660
      %v1928 = vpack.c.b16 %v1664, %v1661
      %v1929 = vpack.c.b16 %v1668, %v1665
      %v1930 = vpack.c.b16 %v1669, %v1666
      %v1931 = vpack.c.b16 %v1670, %v1667
      %v1932 = vpack.c.b16 %v1674, %v1671
      %v1933 = vpack.c.b16 %v1675, %v1672
      %v1934 = vpack.c.b16 %v1676, %v1673
      %v1935 = vpack.c.b16 %v1680, %v1677
      %v1936 = vpack.c.b16 %v1681, %v1678
      %v1937 = vpack.c.b16 %v1682, %v1679
      %v1938 = vpack.c.b16 %v1686, %v1683
      %v1939 = vpack.c.b16 %v1687, %v1684
      %v1940 = vpack.c.b16 %v1688, %v1685
      %v1941 = vpack.c.b16 %v1692, %v1689
      %v1942 = vpack.c.b16 %v1693, %v1690
      %v1943 = vpack.c.b16 %v1694, %v1691
      %v1944 = vpack.c.b16 %v1698, %v1695
      %v1945 = vpack.c.b16 %v1699, %v1696
      %v1946 = vpack.c.b16 %v1700, %v1697
      %v1947 = vpack.c.b16 %v1704, %v1701
      %v1948 = vpack.c.b16 %v1705, %v1702
      %v1949 = vpack.c.b16 %v1706, %v1703
      %v1950 = vpack.c.b16 %v1710, %v1707
      %v1951 = vpack.c.b16 %v1711, %v1708
      %v1952 = vpack.c.b16 %v1712, %v1709
      %v1953 = vpack.c.b16 %v1716, %v1713
      %v1954 = vpack.c.b16 %v1717, %v1714
      %v1955 = vpack.c.b16 %v1718, %v1715
      %v1956 = vpack.c.b16 %v1722, %v1719
      %v1957 = vpack.c.b16 %v1723, %v1720
      %v1958 = vpack.c.b16 %v1724, %v1721
      %v1959 = vpack.c.b16 %v1728, %v1725
      %v1960 = vpack.c.b16 %v1729, %v1726
      %v1961 = vpack.c.b16 %v1730, %v1727
      %v1962 = vpack.c.b16 %v1734, %v1731
      %v1963 = vpack.c.b16 %v1735, %v1732
      %v1964 = vpack.c.b16 %v1736, %v1733
      %v1965 = vpack.c.b16 %v1740, %v1737
      %v1966 = vpack.c.b16 %v1741, %v1738
      %v1967 = vpack.c.b16 %v1742, %v1739
      %v1968 = vpack.c.b16 %v1746, %v1743
      %v1969 = vpack.c.b16 %v1747, %v1744
      %v1970 = vpack.c.b16 %v1748, %v1745
      %v1971 = vpack.c.b16 %v1752, %v1749
      %v1972 = vpack.c.b16 %v1753, %v1750
      %v1973 = vpack.c.b16 %v1754, %v1751
      %v1974 = vpack.c.b16 %v1758, %v1755
      %v1975 = vpack.c.b16 %v1759, %v1756
      %v1976 = vpack.c.b16 %v1760, %v1757
      %v1977 = vpack.c.b16 %v1764, %v1761
      %v1978 = vpack.c.b16 %v1765, %v1762
      %v1979 = vpack.c.b16 %v1766, %v1763
      %v1980 = vpack.c.b16 %v1770, %v1767
      %v1981 = vpack.c.b16 %v1771, %v1768
      %v1982 = vpack.c.b16 %v1772, %v1769
      %v1983 = vpack.c.b16 %v1776, %v1773
      %v1984 = vpack.c.b16 %v1777, %v1774
      %v1985 = vpack.c.b16 %v1778, %v1775
      %v1986 = vpack.c.b16 %v1782, %v1779
      %v1987 = vpack.c.b16 %v1783, %v1780
      %v1988 = vpack.c.b16 %v1784, %v1781
      %v1989 = vpack.c.b16 %v1788, %v1785
      %v1990 = vpack.c.b16 %v1789, %v1786
      %v1991 = vpack.c.b16 %v1790, %v1787
      %v1992 = vpack.c.b16 %v1794, %v1791
      %v1993 = vpack.c.b16 %v1795, %v1792
      %v1994 = vpack.c.b16 %v1796, %v1793
      %v1995 = vpack.c.b16 %v1800, %v1797
      %v1996 = vpack.c.b16 %v1801, %v1798
      %v1997 = vpack.c.b16 %v1802, %v1799
      %v1998 = vpack.c.b16 %v1806, %v1803
      %v1999 = vpack.c.b16 %v1807, %v1804
      %v2000 = vpack.c.b16 %v1808, %v1805
      %v2001 = vpack.c.b16 %v1812, %v1809
      %v2002 = vpack.c.b16 %v1813, %v1810
      %v2003 = vpack.c.b16 %v1814, %v1811
      %v2004 = vpack.c.b16 %v1818, %v1815
      %v2005 = vpack.c.b16 %v1819, %v1816
      %v2006 = vpack.c.b16 %v1820, %v1817
      %v2007 = vpack.c.b16 %v1824, %v1821
      %v2008 = vpack.c.b16 %v1825, %v1822
      %v2009 = vpack.c.b16 %v1826, %v1823
      %v2010 = vpack.c.b16 %v1830, %v1827
      %v2011 = vpack.c.b16 %v1831, %v1828
      %v2012 = vpack.c.b16 %v1832, %v1829
      %v2013 = vpack.c.b16 %v1836, %v1833
      %v2014 = vpack.c.b16 %v1837, %v1834
      %v2015 = vpack.c.b16 %v1838, %v1835
      %v2016 = vpack.c.b16 %v1842, %v1839
      %v2017 = vpack.c.b16 %v1843, %v1840
      %v2018 = vpack.c.b16 %v1844, %v1841
      %v2019 = vpack.c.b16 %v1848, %v1845
      %v2020 = vpack.c.b16 %v1849, %v1846
      %v2021 = vpack.c.b16 %v1850, %v1847
      %v2022 = vpack.c.b16 %v1854, %v1851
      %v2023 = vpack.c.b16 %v1855, %v1852
      %v2024 = vpack.c.b16 %v1856, %v1853
      %v2025 = vpack.c.b16 %v1860, %v1857
      %v2026 = vpack.c.b16 %v1861, %v1858
      %v2027 = vpack.c.b16 %v1862, %v1859
      %v2028 = vpack.c.b16 %v1866, %v1863
      %v2029 = vpack.c.b16 %v1867, %v1864
      %v2030 = vpack.c.b16 %v1868, %v1865
      %v2031 = vpack.c.b16 %v1872, %v1869
      %v2032 = vpack.c.b16 %v1873, %v1870
      %v2033 = vpack.c.b16 %v1874, %v1871
      %v2034 = vpack.c.b16 %v1878, %v1875
      %v2035 = vpack.c.b16 %v1879, %v1876
      %v2036 = vpack.c.b16 %v1880, %v1877
      %v2037 = vpack.c.b16 %v1884, %v1881
      %v2038 = vpack.c.b16 %v1885, %v1882
      %v2039 = vpack.c.b16 %v1886, %v1883
      %v2040 = vpack.c.b16 %v1890, %v1887
      %v2041 = vpack.c.b16 %v1891, %v1888
      %v2042 = vpack.c.b16 %v1892, %v1889
      %v2043 = vpack.c.b16 %v1896, %v1893
      %v2044 = vpack.c.b16 %v1897, %v1894
      %v2045 = vpack.c.b16 %v1898, %v1895
      %v2046 = vpack.c.b16 %v1902, %v1899
      %v2047 = vpack.c.b16 %v1903, %v1900
      %v2048 = vpack.c.b16 %v1904, %v1901
      %2193 = vmatpush.bf16.msra.mxu0 %v1926
      %2194 = vmatpush.bf16.msra.mxu0 %v1923
      %2195 = vmatpush.bf16.msra.mxu0 %v1920
      %2196 = vmatpush.bf16.msra.mxu0 %v1917
      %2197 = vmatpush.bf16.msra.mxu0 %v1914
      %2198 = vmatpush.bf16.msra.mxu0 %v1911
      %2199 = vmatpush.bf16.msra.mxu0 %v1908
      %2200 = vmatpush.bf16.msra.mxu0 %v1905
      %2201 = vmatmul.bf16.gmra.mxu0 %v1219
      %v2202 = vpop.f32.mrf.mxu0
      %v2203 = vadd.f32 %v1419, %v2202
      %v2204 = vpop.f32.mrf.mxu0
      %2205 = vdwg.mxu0
      %2206 = vmatpush.bf16.msra.mxu0 %v1950
      %2207 = vmatpush.bf16.msra.mxu0 %v1947
      %2208 = vmatpush.bf16.msra.mxu0 %v1944
      %2209 = vmatpush.bf16.msra.mxu0 %v1941
      %2210 = vmatpush.bf16.msra.mxu0 %v1938
      %2211 = vmatpush.bf16.msra.mxu0 %v1935
      %2212 = vmatpush.bf16.msra.mxu0 %v1932
      %2213 = vmatpush.bf16.msra.mxu0 %v1929
      %2214 = vmatmul.bf16.gmra.mxu0 %v1220
      %v2215 = vpop.f32.mrf.mxu0
      %v2216 = vadd.f32 %v2203, %v2215
      %v2217 = vpop.f32.mrf.mxu0
      %2218 = vdwg.mxu0
      %2219 = vmatpush.bf16.msra.mxu0 %v1974
      %2220 = vmatpush.bf16.msra.mxu0 %v1971
      %2221 = vmatpush.bf16.msra.mxu0 %v1968
      %2222 = vmatpush.bf16.msra.mxu0 %v1965
      %2223 = vmatpush.bf16.msra.mxu0 %v1962
      %2224 = vmatpush.bf16.msra.mxu0 %v1959
      %2225 = vmatpush.bf16.msra.mxu0 %v1956
      %2226 = vmatpush.bf16.msra.mxu0 %v1953
      %2227 = vmatmul.bf16.gmra.mxu0 %v1221
      %v2228 = vpop.f32.mrf.mxu0
      %v2229 = vadd.f32 %v2216, %v2228
      %v2230 = vpop.f32.mrf.mxu0
      %2231 = vdwg.mxu0
      %2232 = vmatpush.bf16.msra.mxu0 %v1998
      %2233 = vmatpush.bf16.msra.mxu0 %v1995
      %2234 = vmatpush.bf16.msra.mxu0 %v1992
      %2235 = vmatpush.bf16.msra.mxu0 %v1989
      %2236 = vmatpush.bf16.msra.mxu0 %v1986
      %2237 = vmatpush.bf16.msra.mxu0 %v1983
      %2238 = vmatpush.bf16.msra.mxu0 %v1980
      %2239 = vmatpush.bf16.msra.mxu0 %v1977
      %2240 = vmatmul.bf16.gmra.mxu0 %v1222
      %v2241 = vpop.f32.mrf.mxu0
      %v2242 = vadd.f32 %v2229, %v2241
      %v2243 = vpop.f32.mrf.mxu0
      %2244 = vdwg.mxu0
      %2245 = vmatpush.bf16.msra.mxu0 %v2022
      %2246 = vmatpush.bf16.msra.mxu0 %v2019
      %2247 = vmatpush.bf16.msra.mxu0 %v2016
      %2248 = vmatpush.bf16.msra.mxu0 %v2013
      %2249 = vmatpush.bf16.msra.mxu0 %v2010
      %2250 = vmatpush.bf16.msra.mxu0 %v2007
      %2251 = vmatpush.bf16.msra.mxu0 %v2004
      %2252 = vmatpush.bf16.msra.mxu0 %v2001
      %2253 = vmatmul.bf16.gmra.mxu0 %v1223
      %v2254 = vpop.f32.mrf.mxu0
      %v2255 = vadd.f32 %v2242, %v2254
      %v2256 = vpop.f32.mrf.mxu0
      %2257 = vdwg.mxu0
      %2258 = vmatpush.bf16.msra.mxu0 %v2046
      %2259 = vmatpush.bf16.msra.mxu0 %v2043
      %2260 = vmatpush.bf16.msra.mxu0 %v2040
      %2261 = vmatpush.bf16.msra.mxu0 %v2037
      %2262 = vmatpush.bf16.msra.mxu0 %v2034
      %2263 = vmatpush.bf16.msra.mxu0 %v2031
      %2264 = vmatpush.bf16.msra.mxu0 %v2028
      %2265 = vmatpush.bf16.msra.mxu0 %v2025
      %2266 = vmatmul.bf16.gmra.mxu0 %v1224
      %v2267 = vpop.f32.mrf.mxu0
      %v2268 = vadd.f32 %v2255, %v2267
      %v2269 = vpop.f32.mrf.mxu0
      %2270 = vdwg.mxu0
      %2271 = vmatpush.bf16.msra.mxu0 %v1927
      %2272 = vmatpush.bf16.msra.mxu0 %v1924
      %2273 = vmatpush.bf16.msra.mxu0 %v1921
      %2274 = vmatpush.bf16.msra.mxu0 %v1918
      %2275 = vmatpush.bf16.msra.mxu0 %v1915
      %2276 = vmatpush.bf16.msra.mxu0 %v1912
      %2277 = vmatpush.bf16.msra.mxu0 %v1909
      %2278 = vmatpush.bf16.msra.mxu0 %v1906
      %2279 = vmatmul.bf16.gmra.mxu0 %v1219
      %v2280 = vpop.f32.mrf.mxu0
      %v2281 = vadd.f32 %v1420, %v2280
      %v2282 = vpop.f32.mrf.mxu0
      %2283 = vdwg.mxu0
      %2284 = vmatpush.bf16.msra.mxu0 %v1951
      %2285 = vmatpush.bf16.msra.mxu0 %v1948
      %2286 = vmatpush.bf16.msra.mxu0 %v1945
      %2287 = vmatpush.bf16.msra.mxu0 %v1942
      %2288 = vmatpush.bf16.msra.mxu0 %v1939
      %2289 = vmatpush.bf16.msra.mxu0 %v1936
      %2290 = vmatpush.bf16.msra.mxu0 %v1933
      %2291 = vmatpush.bf16.msra.mxu0 %v1930
      %2292 = vmatmul.bf16.gmra.mxu0 %v1220
      %v2293 = vpop.f32.mrf.mxu0
      %v2294 = vadd.f32 %v2281, %v2293
      %v2295 = vpop.f32.mrf.mxu0
      %2296 = vdwg.mxu0
      %2297 = vmatpush.bf16.msra.mxu0 %v1975
      %2298 = vmatpush.bf16.msra.mxu0 %v1972
      %2299 = vmatpush.bf16.msra.mxu0 %v1969
      %2300 = vmatpush.bf16.msra.mxu0 %v1966
      %2301 = vmatpush.bf16.msra.mxu0 %v1963
      %2302 = vmatpush.bf16.msra.mxu0 %v1960
      %2303 = vmatpush.bf16.msra.mxu0 %v1957
      %2304 = vmatpush.bf16.msra.mxu0 %v1954
      %2305 = vmatmul.bf16.gmra.mxu0 %v1221
      %v2306 = vpop.f32.mrf.mxu0
      %v2307 = vadd.f32 %v2294, %v2306
      %v2308 = vpop.f32.mrf.mxu0
      %2309 = vdwg.mxu0
      %2310 = vmatpush.bf16.msra.mxu0 %v1999
      %2311 = vmatpush.bf16.msra.mxu0 %v1996
      %2312 = vmatpush.bf16.msra.mxu0 %v1993
      %2313 = vmatpush.bf16.msra.mxu0 %v1990
      %2314 = vmatpush.bf16.msra.mxu0 %v1987
      %2315 = vmatpush.bf16.msra.mxu0 %v1984
      %2316 = vmatpush.bf16.msra.mxu0 %v1981
      %2317 = vmatpush.bf16.msra.mxu0 %v1978
      %2318 = vmatmul.bf16.gmra.mxu0 %v1222
      %v2319 = vpop.f32.mrf.mxu0
      %v2320 = vadd.f32 %v2307, %v2319
      %v2321 = vpop.f32.mrf.mxu0
      %2322 = vdwg.mxu0
      %2323 = vmatpush.bf16.msra.mxu0 %v2023
      %2324 = vmatpush.bf16.msra.mxu0 %v2020
      %2325 = vmatpush.bf16.msra.mxu0 %v2017
      %2326 = vmatpush.bf16.msra.mxu0 %v2014
      %2327 = vmatpush.bf16.msra.mxu0 %v2011
      %2328 = vmatpush.bf16.msra.mxu0 %v2008
      %2329 = vmatpush.bf16.msra.mxu0 %v2005
      %2330 = vmatpush.bf16.msra.mxu0 %v2002
      %2331 = vmatmul.bf16.gmra.mxu0 %v1223
      %v2332 = vpop.f32.mrf.mxu0
      %v2333 = vadd.f32 %v2320, %v2332
      %v2334 = vpop.f32.mrf.mxu0
      %2335 = vdwg.mxu0
      %2336 = vmatpush.bf16.msra.mxu0 %v2047
      %2337 = vmatpush.bf16.msra.mxu0 %v2044
      %2338 = vmatpush.bf16.msra.mxu0 %v2041
      %2339 = vmatpush.bf16.msra.mxu0 %v2038
      %2340 = vmatpush.bf16.msra.mxu0 %v2035
      %2341 = vmatpush.bf16.msra.mxu0 %v2032
      %2342 = vmatpush.bf16.msra.mxu0 %v2029
      %2343 = vmatpush.bf16.msra.mxu0 %v2026
      %2344 = vmatmul.bf16.gmra.mxu0 %v1224
      %v2345 = vpop.f32.mrf.mxu0
      %v2346 = vadd.f32 %v2333, %v2345
      %v2347 = vpop.f32.mrf.mxu0
      %2348 = vdwg.mxu0
      %2349 = vmatpush.bf16.msra.mxu0 %v1928
      %2350 = vmatpush.bf16.msra.mxu0 %v1925
      %2351 = vmatpush.bf16.msra.mxu0 %v1922
      %2352 = vmatpush.bf16.msra.mxu0 %v1919
      %2353 = vmatpush.bf16.msra.mxu0 %v1916
      %2354 = vmatpush.bf16.msra.mxu0 %v1913
      %2355 = vmatpush.bf16.msra.mxu0 %v1910
      %2356 = vmatpush.bf16.msra.mxu0 %v1907
      %2357 = vmatmul.bf16.gmra.mxu0 %v1219
      %v2358 = vpop.f32.mrf.mxu0
      %v2359 = vadd.f32 %v1421, %v2358
      %v2360 = vpop.f32.mrf.mxu0
      %2361 = vdwg.mxu0
      %2362 = vmatpush.bf16.msra.mxu0 %v1952
      %2363 = vmatpush.bf16.msra.mxu0 %v1949
      %2364 = vmatpush.bf16.msra.mxu0 %v1946
      %2365 = vmatpush.bf16.msra.mxu0 %v1943
      %2366 = vmatpush.bf16.msra.mxu0 %v1940
      %2367 = vmatpush.bf16.msra.mxu0 %v1937
      %2368 = vmatpush.bf16.msra.mxu0 %v1934
      %2369 = vmatpush.bf16.msra.mxu0 %v1931
      %2370 = vmatmul.bf16.gmra.mxu0 %v1220
      %v2371 = vpop.f32.mrf.mxu0
      %v2372 = vadd.f32 %v2359, %v2371
      %v2373 = vpop.f32.mrf.mxu0
      %2374 = vdwg.mxu0
      %2375 = vmatpush.bf16.msra.mxu0 %v1976
      %2376 = vmatpush.bf16.msra.mxu0 %v1973
      %2377 = vmatpush.bf16.msra.mxu0 %v1970
      %2378 = vmatpush.bf16.msra.mxu0 %v1967
      %2379 = vmatpush.bf16.msra.mxu0 %v1964
      %2380 = vmatpush.bf16.msra.mxu0 %v1961
      %2381 = vmatpush.bf16.msra.mxu0 %v1958
      %2382 = vmatpush.bf16.msra.mxu0 %v1955
      %2383 = vmatmul.bf16.gmra.mxu0 %v1221
      %v2384 = vpop.f32.mrf.mxu0
      %v2385 = vadd.f32 %v2372, %v2384
      %v2386 = vpop.f32.mrf.mxu0
      %2387 = vdwg.mxu0
      %2388 = vmatpush.bf16.msra.mxu0 %v2000
      %2389 = vmatpush.bf16.msra.mxu0 %v1997
      %2390 = vmatpush.bf16.msra.mxu0 %v1994
      %2391 = vmatpush.bf16.msra.mxu0 %v1991
      %2392 = vmatpush.bf16.msra.mxu0 %v1988
      %2393 = vmatpush.bf16.msra.mxu0 %v1985
      %2394 = vmatpush.bf16.msra.mxu0 %v1982
      %2395 = vmatpush.bf16.msra.mxu0 %v1979
      %2396 = vmatmul.bf16.gmra.mxu0 %v1222
      %v2397 = vpop.f32.mrf.mxu0
      %v2398 = vadd.f32 %v2385, %v2397
      %v2399 = vpop.f32.mrf.mxu0
      %2400 = vdwg.mxu0
      %2401 = vmatpush.bf16.msra.mxu0 %v2024
      %2402 = vmatpush.bf16.msra.mxu0 %v2021
      %2403 = vmatpush.bf16.msra.mxu0 %v2018
      %2404 = vmatpush.bf16.msra.mxu0 %v2015
      %2405 = vmatpush.bf16.msra.mxu0 %v2012
      %2406 = vmatpush.bf16.msra.mxu0 %v2009
      %2407 = vmatpush.bf16.msra.mxu0 %v2006
      %2408 = vmatpush.bf16.msra.mxu0 %v2003
      %2409 = vmatmul.bf16.gmra.mxu0 %v1223
      %v2410 = vpop.f32.mrf.mxu0
      %v2411 = vadd.f32 %v2398, %v2410
      %v2412 = vpop.f32.mrf.mxu0
      %2413 = vdwg.mxu0
      %2414 = vmatpush.bf16.msra.mxu0 %v2048
      %2415 = vmatpush.bf16.msra.mxu0 %v2045
      %2416 = vmatpush.bf16.msra.mxu0 %v2042
      %2417 = vmatpush.bf16.msra.mxu0 %v2039
      %2418 = vmatpush.bf16.msra.mxu0 %v2036
      %2419 = vmatpush.bf16.msra.mxu0 %v2033
      %2420 = vmatpush.bf16.msra.mxu0 %v2030
      %2421 = vmatpush.bf16.msra.mxu0 %v2027
      %2422 = vmatmul.bf16.gmra.mxu0 %v1224
      %v2423 = vpop.f32.mrf.mxu0
      %v2424 = vadd.f32 %v2411, %v2423
      %v2425 = vpop.f32.mrf.mxu0
      %2426 = vdwg.mxu0
      %v2427 = vmax.f32 %v2268, 0.0
      %2428 = vst [vmem:[#allocation10] sm:$0xff] %v2346
      %2429 = vst [vmem:[#allocation10 + $0x8] sm:$0xff] %v2424
      %v2430 = vpack.c.bf16 %v2427, %v2427
      %v2431 = vld [vmem:[#allocation8] sm:$0xf]
      %v2432 = vld [vmem:[#allocation8 + $0x4] sm:$0xf]
      %v2433 = vld [vmem:[#allocation8 + $0x8] sm:$0xf]
      %v2434 = vld [vmem:[#allocation8 + $0xc] sm:$0xf]
      %v2435 = vld [vmem:[#allocation8 + $0x10] sm:$0xf]
      %v2436 = vld [vmem:[#allocation8 + $0x14] sm:$0xf]
      %v2437 = vld [vmem:[#allocation8 + $0x18] sm:$0xf]
      %v2438 = vld [vmem:[#allocation8 + $0x1c] sm:$0xf]
      %v2439 = vld [vmem:[#allocation8 + $0x20] sm:$0xf]
      %v2440 = vld [vmem:[#allocation8 + $0x24] sm:$0xf]
      %v2441 = vld [vmem:[#allocation8 + $0x28] sm:$0xf]
      %v2442 = vld [vmem:[#allocation8 + $0x2c] sm:$0xf]
      %v2443 = vld [vmem:[#allocation8 + $0x30] sm:$0xf]
      %v2444 = vld [vmem:[#allocation8 + $0x34] sm:$0xf]
      %v2445 = vld [vmem:[#allocation8 + $0x38] sm:$0xf]
      %v2446 = vld [vmem:[#allocation8 + $0x3c] sm:$0xf]
      %v2447 = vld [vmem:[%s6] sm:$0x1]
      %v2449 = vperm.slane %v2447, 0
      %v2467 = vunpack.c.l.b16 %v2431
      %v2468 = vunpack.c.l.b16 %v2432
      %v2469 = vunpack.c.l.b16 %v2433
      %v2470 = vunpack.c.l.b16 %v2434
      %v2471 = vunpack.c.l.b16 %v2435
      %v2472 = vunpack.c.l.b16 %v2436
      %v2473 = vunpack.c.l.b16 %v2437
      %v2474 = vunpack.c.l.b16 %v2438
      %v2475 = vunpack.c.l.b16 %v2439
      %v2476 = vunpack.c.l.b16 %v2440
      %v2477 = vunpack.c.l.b16 %v2441
      %v2478 = vunpack.c.l.b16 %v2442
      %v2479 = vunpack.c.l.b16 %v2443
      %v2480 = vunpack.c.l.b16 %v2444
      %v2481 = vunpack.c.l.b16 %v2445
      %v2482 = vunpack.c.l.b16 %v2446
      %v2483 = vpack.c.b16 %v2468, %v2467
      %v2484 = vpack.c.b16 %v2470, %v2469
      %v2485 = vpack.c.b16 %v2472, %v2471
      %v2486 = vpack.c.b16 %v2474, %v2473
      %v2487 = vpack.c.b16 %v2476, %v2475
      %v2488 = vpack.c.b16 %v2478, %v2477
      %v2489 = vpack.c.b16 %v2480, %v2479
      %v2490 = vpack.c.b16 %v2482, %v2481
      %2499 = vmatpush.bf16.msra.mxu0 %v2490
      %2500 = vmatpush.bf16.msra.mxu0 %v2489
      %2501 = vmatpush.bf16.msra.mxu0 %v2488
      %2502 = vmatpush.bf16.msra.mxu0 %v2487
      %2503 = vmatpush.bf16.msra.mxu0 %v2486
      %2504 = vmatpush.bf16.msra.mxu0 %v2485
      %2505 = vmatpush.bf16.msra.mxu0 %v2484
      %2506 = vmatpush.bf16.msra.mxu0 %v2483
      %2507 = vmatmul.bf16.gmra.mxu0 %v2430
      %v2508 = vpop.f32.mrf.mxu0
      %v2509 = vadd.f32 %v2449, %v2508
      %v2510 = vpop.f32.mrf.mxu0
      %2511 = vdwg.mxu0
      %2512 = vst [vmem:[#allocation9] sm:$0xff] %v2509
    $region49: #{tpu_custom_call.1} parent=1 // pred_fallthru
      _
    // Predicated region
    $region50: #{tpu_custom_call.1} parent=1 // pred_check
      _
    $region51: #{tpu_custom_call.1} parent=1 // pred_check_branch
      %2514 = sbr.rel (0) target = $region53
    $region52: #{tpu_custom_call.1} parent=1 // pred_region
      %2516 = vsyncadd [#allocation5], 0
      %s2518 = sshll.u32 [#allocation9], 4
      %s2519 = int_to_ptr.vmem [resolvable:$true] %s2518
      %s2520 = sshll.u32 %s7, 4
      %s2521 = int_to_ptr.hbm [resolvable:$true] %s2520
      %2523 = dma.vmem_to_hbm [thread:$0]  %s2519, 128, %s2521, [#allocation5]
    $region53: #{tpu_custom_call.1} parent=1 // pred_fallthru
      _
    // Predicated region
    $region54: #{tpu_custom_call.1} parent=1 // pred_check
      _
    $region55: #{tpu_custom_call.1} parent=1 // pred_check_branch
      %2525 = sbr.rel (0) target = $region57
    $region56: #{tpu_custom_call.1} parent=1 // pred_region
      %2527 = vsyncadd [#allocation11], 0
      %s2529 = sshll.u32 [#allocation10], 4
      %s2530 = int_to_ptr.vmem [resolvable:$true] %s2529
      %s2531 = sshll.u32 %s8, 4
      %s2532 = int_to_ptr.hbm [resolvable:$true] %s2531
      %2534 = dma.vmem_to_hbm [thread:$0]  %s2530, 256, %s2532, [#allocation11]
    $region57: #{tpu_custom_call.1} parent=1 // pred_fallthru
      _
    // Predicated region
    $region58: #{tpu_custom_call.1} parent=1 // pred_check
      _
    $region59: #{tpu_custom_call.1} parent=1 // pred_check_branch
      %2536 = sbr.rel (0) target = $region61
    $region60: #{tpu_custom_call.1} parent=1 // pred_region
      %2538 = dma.done [#allocation5], 128
    $region61: #{tpu_custom_call.1} parent=1 // pred_fallthru
      _
    // Predicated region
    $region62: #{tpu_custom_call.1} parent=1 // pred_check
      _
    $region63: #{tpu_custom_call.1} parent=1 // pred_check_branch
      %2540 = sbr.rel (0) target = $region65
    $region64: #{tpu_custom_call.1} parent=1 // pred_region
      %2542 = dma.done [#allocation11], 256
    $region65: #{tpu_custom_call.1} parent=1 // pred_fallthru
      _
    %2543 = vsyncpa [#allocation4], 1
    %2544 = vsyncpa [#allocation7], 1
    %2545 = vsyncpa [#allocation5], 1
    %2546 = vsyncpa [#allocation11], 1

</llo_original>
